<compile_context>
chip_gen: v7x
topology: tpu7x:2x2x1
jax: 0.10.0
libtpu: 0.0.40
codegen_flags: <defaults>
</compile_context>

<pallas_src>
import jax
import jax.numpy as jnp
from jax.experimental import pallas as pl
from jax.experimental.pallas import tpu as pltpu


def _mlp_kernel(x_ref, w1_ref, b1_ref, w2_ref, b2_ref, out_ref):
    """Fused fc1 -> ReLU -> fc2 on one (TB, F) batch tile.

    x arrives f32 and is cast to bf16 in-kernel (fused with the tile load);
    both matmuls accumulate in f32 via preferred_element_type; bias add /
    ReLU stay f32; the final store casts to out_ref.dtype (bf16 by default).
    """
    x = x_ref[...].astype(w1_ref.dtype)                        # (TB, F) bf16
    h = jnp.dot(x, w1_ref[...], preferred_element_type=jnp.float32)
    h = jnp.maximum(h + b1_ref[...], 0.0)                      # (TB, 128) f32
    y = jnp.dot(h.astype(w2_ref.dtype), w2_ref[...],
                preferred_element_type=jnp.float32)
    out_ref[...] = (y + b2_ref[...]).astype(out_ref.dtype)     # (TB, E)


def _pick_batch_tile(B, max_tile):
    """Largest tile <= max_tile that still yields >= 2 grid steps (v7x has two
    TensorCores sharing the 'parallel' axis), rounded to a 256-row multiple."""
    half = pl.cdiv(B, 2)
    tile = ((half + 255) // 256) * 256
    return max(256, min(max_tile, tile))


def music_embedding_net(x, w1, b1, w2, b2, *, max_batch_tile=2048,
                        pallas_min_batch=256, compute_dtype=jnp.bfloat16,
                        out_dtype=jnp.bfloat16):
    """x: (B, input_size) f32. Returns (B, embedding_size) in out_dtype."""
    B, F = x.shape
    H = w1.shape[1]
    E = w2.shape[1]
    b1 = b1.reshape(1, H).astype(jnp.float32)
    b2 = b2.reshape(1, E).astype(jnp.float32)
    w1c = w1.astype(compute_dtype)   # tiny one-time casts (constant-folded
    w2c = w2.astype(compute_dtype)   # by XLA when weights are parameters)

    # Tiny-batch dispatch: pallas_call launch + pipeline prologue/epilogue
    # can't be amortised -> run the same bf16/f32-acc math directly in XLA.
    if B < pallas_min_batch:
        xh = x.astype(compute_dtype)
        h = jnp.maximum(
            jnp.dot(xh, w1c, preferred_element_type=jnp.float32) + b1, 0.0)
        y = jnp.dot(h.astype(compute_dtype), w2c,
                    preferred_element_type=jnp.float32) + b2
        return y.astype(out_dtype)

    batch_tile = _pick_batch_tile(B, max_batch_tile)
    n_tiles = pl.cdiv(B, batch_tile)         # ragged last tile handled by Pallas

    # Explicit VMEM budget: double-buffered x/out tiles, resident weights,
    # plus the in-kernel f32 intermediate h and the bf16 recasts of x and h.
    out_itm = jnp.dtype(out_dtype).itemsize
    c_itm = jnp.dtype(compute_dtype).itemsize
    vmem_est = (2 * batch_tile * F * 4                      # x blocks (f32 in)
                + 2 * batch_tile * E * out_itm              # out blocks
                + 2 * (F * H * c_itm + H * 4 + H * E * c_itm + E * 4)  # weights
                + batch_tile * F * c_itm                    # bf16 x copy
                + batch_tile * H * (4 + c_itm))             # h f32 + bf16 recast
    vmem_limit = 32 * 1024 * 1024            # v7x scoped default; v5e/v6e have more
    assert vmem_est < vmem_limit // 2, (
        f"batch_tile too large for VMEM: est {vmem_est} B, limit {vmem_limit} B")

    cost = pl.CostEstimate(
        flops=2 * B * F * H + 2 * B * H * E,
        transcendentals=0,
        bytes_accessed=B * (F * 4 + E * out_itm)
        + F * H * c_itm + H * E * c_itm + (H + E) * 4)

    out = pl.pallas_call(
        _mlp_kernel,
        out_shape=jax.ShapeDtypeStruct((B, E), out_dtype),
        grid_spec=pltpu.PrefetchScalarGridSpec(
            num_scalar_prefetch=0,
            grid=(n_tiles,),
            in_specs=[
                # Batch-tiled activations, f32 in HBM (cast in-kernel).
                pl.BlockSpec((batch_tile, F), lambda i: (i, 0)),
                # Weights / biases: tiny, resident every step (constant map).
                pl.BlockSpec((F, H), lambda i: (0, 0)),
                pl.BlockSpec((1, H), lambda i: (0, 0)),
                pl.BlockSpec((H, E), lambda i: (0, 0)),
                pl.BlockSpec((1, E), lambda i: (0, 0)),
            ],
            out_specs=pl.BlockSpec((batch_tile, E), lambda i: (i, 0)),
        ),
        compiler_params=pltpu.CompilerParams(
            dimension_semantics=("parallel",),
            vmem_limit_bytes=vmem_limit,
        ),
        cost_estimate=cost,
    )(x, w1c, b1, w2c, b2)
    # TODO(synk): E=22 output is lane-sparse (masked vst.msk); only worth
    # padding/fusing the downstream consumer if profiling on v5e shows a
    # store-slot-bound wall-vs-compute gap.
    return out


def init_params(key, input_size, hidden=128, embedding_size=22):
    """Deterministic synthetic parameters (same shapes as the nn.Module)."""
    k1, k2, k3, k4 = jax.random.split(key, 4)
    w1 = jax.random.normal(k1, (input_size, hidden), jnp.float32) * 0.1
    b1 = jax.random.normal(k2, (1, hidden), jnp.float32) * 0.1
    w2 = jax.random.normal(k3, (hidden, embedding_size), jnp.float32) * 0.1
    b2 = jax.random.normal(k4, (1, embedding_size), jnp.float32) * 0.1
    return w1, b1, w2, b2


if __name__ == "__main__":
    key = jax.random.PRNGKey(0)
    # input_size = 20 mfcc + spectral_centroid + zero_crossing_rate = 22
    input_size, embedding_size = 22, 22

    kx1, kx2, kp = jax.random.split(key, 3)
    w1, b1, w2, b2 = init_params(kp, input_size, hidden=128,
                                 embedding_size=embedding_size)

    def ref_fwd(x):
        return jnp.maximum(x @ w1 + b1, 0.0) @ w2 + b2

    # (1) Pallas path: B=1000 exercises both the 2-step "parallel" grid
    #     (batch_tile=512) and the ragged last tile (488 rows).
    x_big = jax.random.normal(kx1, (1000, input_size), jnp.float32)
    out_big = jax.block_until_ready(music_embedding_net(x_big, w1, b1, w2, b2))
    assert out_big.shape == (1000, embedding_size)
    # bf16 MXU inputs / bf16 output with f32 accumulation -> relaxed tolerance.
    assert jnp.allclose(out_big.astype(jnp.float32), ref_fwd(x_big),
                        atol=5e-2, rtol=5e-2)

    # (2) Tiny-batch path (B=8 demo): XLA fallback with the same bf16 math.
    x_small = jax.random.normal(kx2, (8, input_size), jnp.float32)
    out_small = jax.block_until_ready(
        music_embedding_net(x_small, w1, b1, w2, b2))
    assert out_small.shape == (8, embedding_size)
    assert jnp.allclose(out_small.astype(jnp.float32), ref_fwd(x_small),
                        atol=5e-2, rtol=5e-2)

    print("KERNEL_OK")
</pallas_src>

<mosaic_0001>
module attributes {stable_mosaic.version = 11 : i64} {
  func.func @_mlp_kernel(%arg0: i32, %arg1: memref<512x22xf32, #tpu.memory_space<vmem>>, %arg2: memref<22x128xbf16, #tpu.memory_space<vmem>>, %arg3: memref<1x128xf32, #tpu.memory_space<vmem>>, %arg4: memref<128x22xbf16, #tpu.memory_space<vmem>>, %arg5: memref<1x22xf32, #tpu.memory_space<vmem>>, %arg6: memref<512x22xbf16, #tpu.memory_space<vmem>>) attributes {dimension_semantics = [#tpu.dimension_semantics<parallel>], iteration_bounds = array<i64: 2>, scalar_prefetch = 0 : i64, scratch_operands = 0 : i64, tpu.core_type = #tpu.core_type<tc>, window_params = [{transform_indices = @transform_0, window_bounds = array<i64: 512, 22>}, {pipeline_mode = #tpu.pipeline_mode<synchronous>, transform_indices = @transform_1, window_bounds = array<i64: 22, 128>}, {pipeline_mode = #tpu.pipeline_mode<synchronous>, transform_indices = @transform_2, window_bounds = array<i64: 1, 128>}, {pipeline_mode = #tpu.pipeline_mode<synchronous>, transform_indices = @transform_3, window_bounds = array<i64: 128, 22>}, {pipeline_mode = #tpu.pipeline_mode<synchronous>, transform_indices = @transform_4, window_bounds = array<i64: 1, 22>}, {transform_indices = @transform_5, window_bounds = array<i64: 512, 22>}]} {
    %c0 = arith.constant 0 : index
    %c0_0 = arith.constant 0 : index
    %0 = vector.load %arg1[%c0, %c0_0] : memref<512x22xf32, #tpu.memory_space<vmem>>, vector<512x22xf32>
    %1 = arith.truncf %0 : vector<512x22xf32> to vector<512x22xbf16>
    %c0_1 = arith.constant 0 : index
    %c0_2 = arith.constant 0 : index
    %2 = vector.load %arg2[%c0_1, %c0_2] : memref<22x128xbf16, #tpu.memory_space<vmem>>, vector<22x128xbf16>
    %cst = arith.constant dense<0.000000e+00> : vector<512x128xf32>
    %3 = tpu.matmul %1, %2, %cst {dimension_numbers = #tpu.dot_dimension_numbers<[1], [0], [0], [1], [0, 0, 1, 1], [], []>} : vector<512x22xbf16>, vector<22x128xbf16>, vector<512x128xf32> -> vector<512x128xf32>
    %c0_3 = arith.constant 0 : index
    %c0_4 = arith.constant 0 : index
    %4 = vector.load %arg3[%c0_3, %c0_4] : memref<1x128xf32, #tpu.memory_space<vmem>>, vector<1x128xf32>
    %5 = vector.broadcast %4 : vector<1x128xf32> to vector<512x128xf32>
    %6 = arith.addf %3, %5 : vector<512x128xf32>
    %cst_5 = arith.constant 0.000000e+00 : f32
    %7 = vector.broadcast %cst_5 : f32 to vector<512x128xf32>
    %8 = arith.maximumf %6, %7 : vector<512x128xf32>
    %9 = arith.truncf %8 : vector<512x128xf32> to vector<512x128xbf16>
    %c0_6 = arith.constant 0 : index
    %c0_7 = arith.constant 0 : index
    %10 = vector.load %arg4[%c0_6, %c0_7] : memref<128x22xbf16, #tpu.memory_space<vmem>>, vector<128x22xbf16>
    %cst_8 = arith.constant dense<0.000000e+00> : vector<512x22xf32>
    %11 = tpu.matmul %9, %10, %cst_8 {dimension_numbers = #tpu.dot_dimension_numbers<[1], [0], [0], [1], [0, 0, 1, 1], [], []>} : vector<512x128xbf16>, vector<128x22xbf16>, vector<512x22xf32> -> vector<512x22xf32>
    %c0_9 = arith.constant 0 : index
    %c0_10 = arith.constant 0 : index
    %12 = vector.load %arg5[%c0_9, %c0_10] : memref<1x22xf32, #tpu.memory_space<vmem>>, vector<1x22xf32>
    %13 = vector.broadcast %12 : vector<1x22xf32> to vector<512x22xf32>
    %14 = arith.addf %11, %13 : vector<512x22xf32>
    %15 = arith.truncf %14 : vector<512x22xf32> to vector<512x22xbf16>
    %c0_11 = arith.constant 0 : index
    %c0_12 = arith.constant 0 : index
    %16 = vector.load %arg6[%c0_11, %c0_12] : memref<512x22xbf16, #tpu.memory_space<vmem>>, vector<512x22xbf16>
    tpu.vector_store %arg6[%c0_11, %c0_12], %15 {strides = array<i32>} : memref<512x22xbf16, #tpu.memory_space<vmem>>, vector<512x22xbf16>,
    return
  }
  func.func @transform_0(%arg0: i32) -> (i32, i32) {
    %c0_i32 = arith.constant 0 : i32
    %c0_i32_0 = arith.constant 0 : i32
    return %arg0, %c0_i32 : i32, i32
  }
  func.func @transform_1(%arg0: i32) -> (i32, i32) {
    %c0_i32 = arith.constant 0 : i32
    %c0_i32_0 = arith.constant 0 : i32
    %c0_i32_1 = arith.constant 0 : i32
    return %c0_i32, %c0_i32_0 : i32, i32
  }
  func.func @transform_2(%arg0: i32) -> (i32, i32) {
    %c0_i32 = arith.constant 0 : i32
    %c0_i32_0 = arith.constant 0 : i32
    %c0_i32_1 = arith.constant 0 : i32
    return %c0_i32, %c0_i32_0 : i32, i32
  }
  func.func @transform_3(%arg0: i32) -> (i32, i32) {
    %c0_i32 = arith.constant 0 : i32
    %c0_i32_0 = arith.constant 0 : i32
    %c0_i32_1 = arith.constant 0 : i32
    return %c0_i32, %c0_i32_0 : i32, i32
  }
  func.func @transform_4(%arg0: i32) -> (i32, i32) {
    %c0_i32 = arith.constant 0 : i32
    %c0_i32_0 = arith.constant 0 : i32
    %c0_i32_1 = arith.constant 0 : i32
    return %c0_i32, %c0_i32_0 : i32, i32
  }
  func.func @transform_5(%arg0: i32) -> (i32, i32) {
    %c0_i32 = arith.constant 0 : i32
    %c0_i32_0 = arith.constant 0 : i32
    return %arg0, %c0_i32 : i32, i32
  }
}

</mosaic_0001>

<llo_original>
// kernel: tpu_custom_call.1
$region0: #{tpu_custom_call.1}
  #allocation0 [shape = 'u32[]', space=smem, size = 0x4, offset = 0x4, fixed_abs, tag = 'smem constant byte address 0x4 - core index']
  #allocation1 [shape = 'u32[144,128]{1,0:T(1,128)}', space=vmem, size = 0x12000, scoped, tag = 'internal scratch']
  %s0 = inlined_call_operand.vmem [shape: f32[1000,22], index: 0, kind: input, shape index: {}]
  %s1 = inlined_call_operand.vmem [shape: bf16[22,128], index: 1, kind: input, shape index: {}]
  %s2 = inlined_call_operand.vmem [shape: f32[1,128], index: 2, kind: input, shape index: {}]
  %s3 = inlined_call_operand.vmem [shape: bf16[128,22], index: 3, kind: input, shape index: {}]
  %s4 = inlined_call_operand.vmem [shape: f32[1,22], index: 4, kind: input, shape index: {}]
  %s5 = inlined_call_operand.vmem [shape: bf16[1000,22], index: 5, kind: output, shape index: {}]
  %s6 = sld [smem:[#allocation0]]
  $region97: #{tpu_custom_call.1} parent=0
    _
  %s8 = ssub.s32 1, %s6
  %s9 = scalar_select 0, %s8, %s6
  $region1: #{tpu_custom_call.1} parent=0
    #allocation2 [shape = 'u8[262144]{0}', space=vmem, size = 0x40000, scoped, tag = 'output window, operand 0']
    loop: start=0, step=1, limit=4
    $region2: #{tpu_custom_call.1} parent=1 // loop_pre_header
      _
    $region3: #{tpu_custom_call.1} parent=1 // loop_header
      %s11 = sphi 0, %s15
      %p12 = scmp.ge.s32.totalorder %s11, 4
      %s21 = sphi 0, %s23
      %s24 = sphi 0, %s21
      %s25 = sphi 0, %s24
      %s41 = sphi 0, %s25
      %s45 = sphi 0, %s45
      %s47 = sphi 0, %s45
      %s48 = sphi 0, %s47
      %s62 = sphi 0, %s48
      %s66 = sphi 0, %s66
      %s68 = sphi 0, %s66
      %s69 = sphi 0, %s68
      %s83 = sphi 0, %s69
      %s87 = sphi 0, %s87
      %s89 = sphi 0, %s87
      %s90 = sphi 0, %s89
      %s104 = sphi 0, %s90
      %s108 = sphi 0, %s108
      %s110 = sphi 0, %s108
      %s111 = sphi 0, %s110
      %s125 = sphi 0, %s111
      %s131 = sphi 0, %s133
      %s134 = sphi 0, %s131
      %s135 = sphi 0, %s134
      %s151 = sphi 0, %s135
    $region4: #{tpu_custom_call.1} parent=1 // loop_header_branch
      %14 = sbr.rel (%p12) target = $region8
    $region5: #{tpu_custom_call.1} parent=1 // loop_body
      %s16 = ssub.s32 %s11, 1
      %s17 = ssub.s32 %s11, 2
      %s18 = sadd.s32 %s11, 1
      %s19 = ssub.s32 %s11, %s18
      %p20 = scmp.eq.s32.totalorder %s19, 0
      %s22 = sadd.s32 %s21, 1
      %s23 = scalar_select %p20, %s21, %s22
      %p26 = pneg %p20
      %p27 = scmp.eq.s32.totalorder %s11, 1
      %p28 = por %p26, %p27
      %p29 = scmp.ne.s32.totalorder %s21, %s24
      %p30 = scmp.eq.s32.totalorder %s11, 0
      %p31 = por %p29, %p30
      %p32 = scmp.ne.s32.totalorder %s21, %s24
      %p33 = scmp.eq.s32.totalorder %s16, 1
      %p34 = por %p32, %p33
      %p35 = scmp.ne.s32.totalorder %s24, %s25
      %p36 = scmp.eq.s32.totalorder %s16, 0
      %p37 = por %p35, %p36
      %p38 = scmp.ne.s32.totalorder %s24, %s25
      %p39 = scmp.eq.s32.totalorder %s17, 1
      %p40 = por %p38, %p39
      %p42 = scmp.ne.s32.totalorder %s25, %s41
      %p43 = scmp.eq.s32.totalorder %s17, 0
      %p44 = por %p42, %p43
      %s46 = sadd.s32 %s45, 1
      %p49 = scmp.eq.s32.totalorder %s11, 1
      %p50 = scmp.ne.s32.totalorder %s45, %s47
      %p51 = scmp.eq.s32.totalorder %s11, 0
      %p52 = por %p50, %p51
      %p53 = scmp.ne.s32.totalorder %s45, %s47
      %p54 = scmp.eq.s32.totalorder %s16, 1
      %p55 = por %p53, %p54
      %p56 = scmp.ne.s32.totalorder %s47, %s48
      %p57 = scmp.eq.s32.totalorder %s16, 0
      %p58 = por %p56, %p57
      %p59 = scmp.ne.s32.totalorder %s47, %s48
      %p60 = scmp.eq.s32.totalorder %s17, 1
      %p61 = por %p59, %p60
      %p63 = scmp.ne.s32.totalorder %s48, %s62
      %p64 = scmp.eq.s32.totalorder %s17, 0
      %p65 = por %p63, %p64
      %s67 = sadd.s32 %s66, 1
      %p70 = scmp.eq.s32.totalorder %s11, 1
      %p71 = scmp.ne.s32.totalorder %s66, %s68
      %p72 = scmp.eq.s32.totalorder %s11, 0
      %p73 = por %p71, %p72
      %p74 = scmp.ne.s32.totalorder %s66, %s68
      %p75 = scmp.eq.s32.totalorder %s16, 1
      %p76 = por %p74, %p75
      %p77 = scmp.ne.s32.totalorder %s68, %s69
      %p78 = scmp.eq.s32.totalorder %s16, 0
      %p79 = por %p77, %p78
      %p80 = scmp.ne.s32.totalorder %s68, %s69
      %p81 = scmp.eq.s32.totalorder %s17, 1
      %p82 = por %p80, %p81
      %p84 = scmp.ne.s32.totalorder %s69, %s83
      %p85 = scmp.eq.s32.totalorder %s17, 0
      %p86 = por %p84, %p85
      %s88 = sadd.s32 %s87, 1
      %p91 = scmp.eq.s32.totalorder %s11, 1
      %p92 = scmp.ne.s32.totalorder %s87, %s89
      %p93 = scmp.eq.s32.totalorder %s11, 0
      %p94 = por %p92, %p93
      %p95 = scmp.ne.s32.totalorder %s87, %s89
      %p96 = scmp.eq.s32.totalorder %s16, 1
      %p97 = por %p95, %p96
      %p98 = scmp.ne.s32.totalorder %s89, %s90
      %p99 = scmp.eq.s32.totalorder %s16, 0
      %p100 = por %p98, %p99
      %p101 = scmp.ne.s32.totalorder %s89, %s90
      %p102 = scmp.eq.s32.totalorder %s17, 1
      %p103 = por %p101, %p102
      %p105 = scmp.ne.s32.totalorder %s90, %s104
      %p106 = scmp.eq.s32.totalorder %s17, 0
      %p107 = por %p105, %p106
      %s109 = sadd.s32 %s108, 1
      %p112 = scmp.eq.s32.totalorder %s11, 1
      %p113 = scmp.ne.s32.totalorder %s108, %s110
      %p114 = scmp.eq.s32.totalorder %s11, 0
      %p115 = por %p113, %p114
      %p116 = scmp.ne.s32.totalorder %s108, %s110
      %p117 = scmp.eq.s32.totalorder %s16, 1
      %p118 = por %p116, %p117
      %p119 = scmp.ne.s32.totalorder %s110, %s111
      %p120 = scmp.eq.s32.totalorder %s16, 0
      %p121 = por %p119, %p120
      %p122 = scmp.ne.s32.totalorder %s110, %s111
      %p123 = scmp.eq.s32.totalorder %s17, 1
      %p124 = por %p122, %p123
      %p126 = scmp.ne.s32.totalorder %s111, %s125
      %p127 = scmp.eq.s32.totalorder %s17, 0
      %p128 = por %p126, %p127
      %s129 = ssub.s32 %s11, %s18
      %p130 = scmp.eq.s32.totalorder %s129, 0
      %s132 = sadd.s32 %s131, 1
      %s133 = scalar_select %p130, %s131, %s132
      %p136 = pneg %p130
      %p137 = scmp.eq.s32.totalorder %s11, 1
      %p138 = por %p136, %p137
      %p139 = scmp.ne.s32.totalorder %s131, %s134
      %p140 = scmp.eq.s32.totalorder %s11, 0
      %p141 = por %p139, %p140
      %p142 = scmp.ne.s32.totalorder %s131, %s134
      %p143 = scmp.eq.s32.totalorder %s16, 1
      %p144 = por %p142, %p143
      %p145 = scmp.ne.s32.totalorder %s134, %s135
      %p146 = scmp.eq.s32.totalorder %s16, 0
      %p147 = por %p145, %p146
      %p148 = scmp.ne.s32.totalorder %s134, %s135
      %p149 = scmp.eq.s32.totalorder %s17, 1
      %p150 = por %p148, %p149
      %p152 = scmp.ne.s32.totalorder %s135, %s151
      %p153 = scmp.eq.s32.totalorder %s17, 0
      %p154 = por %p152, %p153
      %p155 = scmp.le.s32.totalorder 1, %s11
      %p156 = scmp.lt.s32.totalorder %s11, 3
      %p157 = pnand %p155, %p156
      %p158 = pneg %p157
      // Predicated region
      $region9: #{tpu_custom_call.1} parent=5 // pred_check
        _
      $region10: #{tpu_custom_call.1} parent=5 // pred_check_branch
        %160 = sbr.rel (%p157) target = $region12
      $region11: #{tpu_custom_call.1} parent=5 // pred_region
        %s161 = ssub.s32 %s11, 1
        // Predicated region
        $region13: #{tpu_custom_call.1} parent=11 // pred_check
          %p162 = pneg %p58
        $region14: #{tpu_custom_call.1} parent=11 // pred_check_branch
          %164 = sbr.rel (%p162) target = $region16
        $region15: #{tpu_custom_call.1} parent=11 // pred_region
          _
        $region16: #{tpu_custom_call.1} parent=11 // pred_fallthru
          _
        // Predicated region
        $region17: #{tpu_custom_call.1} parent=11 // pred_check
          %p165 = pneg %p79
        $region18: #{tpu_custom_call.1} parent=11 // pred_check_branch
          %167 = sbr.rel (%p165) target = $region20
        $region19: #{tpu_custom_call.1} parent=11 // pred_region
          _
        $region20: #{tpu_custom_call.1} parent=11 // pred_fallthru
          _
        // Predicated region
        $region21: #{tpu_custom_call.1} parent=11 // pred_check
          %p168 = pneg %p100
        $region22: #{tpu_custom_call.1} parent=11 // pred_check_branch
          %170 = sbr.rel (%p168) target = $region24
        $region23: #{tpu_custom_call.1} parent=11 // pred_region
          _
        $region24: #{tpu_custom_call.1} parent=11 // pred_fallthru
          _
        // Predicated region
        $region25: #{tpu_custom_call.1} parent=11 // pred_check
          %p171 = pneg %p121
        $region26: #{tpu_custom_call.1} parent=11 // pred_check_branch
          %173 = sbr.rel (%p171) target = $region28
        $region27: #{tpu_custom_call.1} parent=11 // pred_region
          _
        $region28: #{tpu_custom_call.1} parent=11 // pred_fallthru
          _
      $region12: #{tpu_custom_call.1} parent=5 // pred_fallthru
        _
      %p174 = scmp.lt.s32.totalorder %s11, 2
      // Predicated region
      $region29: #{tpu_custom_call.1} parent=5 // pred_check
        %p175 = pneg %p174
      $region30: #{tpu_custom_call.1} parent=5 // pred_check_branch
        %177 = sbr.rel (%p175) target = $region32
      $region31: #{tpu_custom_call.1} parent=5 // pred_region
        // Predicated region
        $region33: #{tpu_custom_call.1} parent=31 // pred_check
          %p178 = pneg %p31
        $region34: #{tpu_custom_call.1} parent=31 // pred_check_branch
          %180 = sbr.rel (%p178) target = $region36
        $region35: #{tpu_custom_call.1} parent=31 // pred_region
          %s181 = smul.u32 64, %s11
          %s182 = ssub.s32 125, %s181
          %p183 = scmp.lt.s32.totalorder %s182, 64
          %s184 = scalar_select %p183, %s182, 64
          %s185 = smul.u32 128, %s184
          %p186 = scmp.lt.s32.totalorder %s181, 124
          %s187 = scalar_select %p186, %s181, 124
          %s188 = smul.addr %s187, 8
          %s189 = scalar_lea.vmem %s0, %s188
          %s190 = smul.u32 64, %s11
          %s191 = ssub.s32 125, %s190
          %p192 = scmp.lt.s32.totalorder %s191, 64
          %s193 = scalar_select %p192, %s191, 64
          %s194 = smul.u32 128, %s193
        $region36: #{tpu_custom_call.1} parent=31 // pred_fallthru
          _
      $region32: #{tpu_custom_call.1} parent=5 // pred_fallthru
        _
      %p195 = scmp.le.s32.totalorder 1, %s11
      %p196 = scmp.lt.s32.totalorder %s11, 3
      %p197 = pnand %p195, %p196
      %p198 = pneg %p197
      // Predicated region
      $region37: #{tpu_custom_call.1} parent=5 // pred_check
        _
      $region38: #{tpu_custom_call.1} parent=5 // pred_check_branch
        %200 = sbr.rel (%p197) target = $region40
      $region39: #{tpu_custom_call.1} parent=5 // pred_region
        %s201 = ssub.s32 %s11, 1
        %s202 = smul.u32 64, %s16
        %s203 = ssub.s32 125, %s202
        %p204 = scmp.lt.s32.totalorder %s203, 64
        %s205 = scalar_select %p204, %s203, 64
        %s206 = smul.u32 128, %s205
        %p207 = scmp.lt.s32.totalorder %s202, 124
        %s208 = scalar_select %p207, %s202, 124
        %s209 = smul.addr %s208, 8
        %s210 = scalar_lea.vmem %s0, %s209
        %p211 = pneg %p37
        %p212 = pneg %p34
        %p213 = pneg %p58
        %p214 = pneg %p55
        %p215 = pneg %p79
        %p216 = pneg %p76
        %p217 = pneg %p100
        %p218 = pneg %p97
        %p219 = pneg %p121
        %p220 = pneg %p118
        %p221 = pneg %p147
        %p222 = pneg %p144
        %s223 = sand.u32 %s134, 1
        %s224 = sand.u32 %s134, 1
        %s225 = smul.addr %s224, 256
        %s226 = scalar_lea.vmem [#allocation2], %s225
        %s227 = smul.u32 64, %s16
        %s228 = ssub.s32 125, %s227
        %p229 = scmp.lt.s32.totalorder %s228, 64
        %s230 = scalar_select %p229, %s228, 64
        %s231 = smul.u32 128, %s230
        %p232 = scmp.lt.s32.totalorder %s227, 124
        %s233 = scalar_select %p232, %s227, 124
        %s234 = smul.addr %s233, 8
        %s235 = scalar_lea.vmem %s0, %s234
        %s236 = smul.u32 64, %s16
        %s237 = ssub.s32 125, %s236
        %p238 = scmp.lt.s32.totalorder %s237, 64
        %s239 = scalar_select %p238, %s237, 64
        %s240 = smul.u32 128, %s239
        %s241 = smul.u32 64, %s16
        %s242 = ssub.s32 125, %s241
        %p243 = scmp.lt.s32.totalorder %s242, 64
        %s244 = scalar_select %p243, %s242, 64
        %s245 = smul.u32 64, %s244
        %v247 = vld [vmem:[%s235] sm:$0xff]
        %v248 = vld [vmem:[%s235 + $0x8] sm:$0xff]
        %v249 = vld [vmem:[%s235 + $0x10] sm:$0xff]
        %v250 = vld [vmem:[%s235 + $0x18] sm:$0xff]
        %v251 = vld [vmem:[%s235 + $0x20] sm:$0xff]
        %v252 = vld [vmem:[%s235 + $0x28] sm:$0xff]
        %v253 = vld [vmem:[%s235 + $0x30] sm:$0xff]
        %v254 = vld [vmem:[%s235 + $0x38] sm:$0xff]
        %v255 = vld [vmem:[%s235 + $0x40] sm:$0xff]
        %v256 = vld [vmem:[%s235 + $0x48] sm:$0xff]
        %v257 = vld [vmem:[%s235 + $0x50] sm:$0xff]
        %v258 = vld [vmem:[%s235 + $0x58] sm:$0xff]
        %v259 = vld [vmem:[%s235 + $0x60] sm:$0xff]
        %v260 = vld [vmem:[%s235 + $0x68] sm:$0xff]
        %v261 = vld [vmem:[%s235 + $0x70] sm:$0xff]
        %v262 = vld [vmem:[%s235 + $0x78] sm:$0xff]
        %v263 = vld [vmem:[%s235 + $0x80] sm:$0xff]
        %v264 = vld [vmem:[%s235 + $0x88] sm:$0xff]
        %v265 = vld [vmem:[%s235 + $0x90] sm:$0xff]
        %v266 = vld [vmem:[%s235 + $0x98] sm:$0xff]
        %v267 = vld [vmem:[%s235 + $0xa0] sm:$0xff]
        %v268 = vld [vmem:[%s235 + $0xa8] sm:$0xff]
        %v269 = vld [vmem:[%s235 + $0xb0] sm:$0xff]
        %v270 = vld [vmem:[%s235 + $0xb8] sm:$0xff]
        %v271 = vld [vmem:[%s235 + $0xc0] sm:$0xff]
        %v272 = vld [vmem:[%s235 + $0xc8] sm:$0xff]
        %v273 = vld [vmem:[%s235 + $0xd0] sm:$0xff]
        %v274 = vld [vmem:[%s235 + $0xd8] sm:$0xff]
        %v275 = vld [vmem:[%s235 + $0xe0] sm:$0xff]
        %v276 = vld [vmem:[%s235 + $0xe8] sm:$0xff]
        %v277 = vld [vmem:[%s235 + $0xf0] sm:$0xff]
        %v278 = vld [vmem:[%s235 + $0xf8] sm:$0xff]
        %v279 = vld [vmem:[%s235 + $0x100] sm:$0xff]
        %v280 = vld [vmem:[%s235 + $0x108] sm:$0xff]
        %v281 = vld [vmem:[%s235 + $0x110] sm:$0xff]
        %v282 = vld [vmem:[%s235 + $0x118] sm:$0xff]
        %v283 = vld [vmem:[%s235 + $0x120] sm:$0xff]
        %v284 = vld [vmem:[%s235 + $0x128] sm:$0xff]
        %v285 = vld [vmem:[%s235 + $0x130] sm:$0xff]
        %v286 = vld [vmem:[%s235 + $0x138] sm:$0xff]
        %v287 = vld [vmem:[%s235 + $0x140] sm:$0xff]
        %v288 = vld [vmem:[%s235 + $0x148] sm:$0xff]
        %v289 = vld [vmem:[%s235 + $0x150] sm:$0xff]
        %v290 = vld [vmem:[%s235 + $0x158] sm:$0xff]
        %v291 = vld [vmem:[%s235 + $0x160] sm:$0xff]
        %v292 = vld [vmem:[%s235 + $0x168] sm:$0xff]
        %v293 = vld [vmem:[%s235 + $0x170] sm:$0xff]
        %v294 = vld [vmem:[%s235 + $0x178] sm:$0xff]
        %v295 = vld [vmem:[%s235 + $0x180] sm:$0xff]
        %v296 = vld [vmem:[%s235 + $0x188] sm:$0xff]
        %v297 = vld [vmem:[%s235 + $0x190] sm:$0xff]
        %v298 = vld [vmem:[%s235 + $0x198] sm:$0xff]
        %v299 = vld [vmem:[%s235 + $0x1a0] sm:$0xff]
        %v300 = vld [vmem:[%s235 + $0x1a8] sm:$0xff]
        %v301 = vld [vmem:[%s235 + $0x1b0] sm:$0xff]
        %v302 = vld [vmem:[%s235 + $0x1b8] sm:$0xff]
        %v303 = vld [vmem:[%s235 + $0x1c0] sm:$0xff]
        %v304 = vld [vmem:[%s235 + $0x1c8] sm:$0xff]
        %v305 = vld [vmem:[%s235 + $0x1d0] sm:$0xff]
        %v306 = vld [vmem:[%s235 + $0x1d8] sm:$0xff]
        %v307 = vld [vmem:[%s235 + $0x1e0] sm:$0xff]
        %v308 = vld [vmem:[%s235 + $0x1e8] sm:$0xff]
        %v309 = vld [vmem:[%s235 + $0x1f0] sm:$0xff]
        %v310 = vld [vmem:[%s235 + $0x1f8] sm:$0xff]
        %v311 = vpack.c.bf16 %v248, %v247
        %v312 = vpack.c.bf16 %v250, %v249
        %v313 = vpack.c.bf16 %v252, %v251
        %v314 = vpack.c.bf16 %v254, %v253
        %v315 = vpack.c.bf16 %v256, %v255
        %v316 = vpack.c.bf16 %v258, %v257
        %v317 = vpack.c.bf16 %v260, %v259
        %v318 = vpack.c.bf16 %v262, %v261
        %v319 = vpack.c.bf16 %v264, %v263
        %v320 = vpack.c.bf16 %v266, %v265
        %v321 = vpack.c.bf16 %v268, %v267
        %v322 = vpack.c.bf16 %v270, %v269
        %v323 = vpack.c.bf16 %v272, %v271
        %v324 = vpack.c.bf16 %v274, %v273
        %v325 = vpack.c.bf16 %v276, %v275
        %v326 = vpack.c.bf16 %v278, %v277
        %v327 = vpack.c.bf16 %v280, %v279
        %v328 = vpack.c.bf16 %v282, %v281
        %v329 = vpack.c.bf16 %v284, %v283
        %v330 = vpack.c.bf16 %v286, %v285
        %v331 = vpack.c.bf16 %v288, %v287
        %v332 = vpack.c.bf16 %v290, %v289
        %v333 = vpack.c.bf16 %v292, %v291
        %v334 = vpack.c.bf16 %v294, %v293
        %v335 = vpack.c.bf16 %v296, %v295
        %v336 = vpack.c.bf16 %v298, %v297
        %v337 = vpack.c.bf16 %v300, %v299
        %v338 = vpack.c.bf16 %v302, %v301
        %v339 = vpack.c.bf16 %v304, %v303
        %v340 = vpack.c.bf16 %v306, %v305
        %v341 = vpack.c.bf16 %v308, %v307
        %v342 = vpack.c.bf16 %v310, %v309
        %v343 = vld [vmem:[%s1] sm:$0xf]
        %v344 = vld [vmem:[%s1 + $0x4] sm:$0xf]
        %v345 = vld [vmem:[%s1 + $0x8] sm:$0x7]
        %v346 = vld [vmem:[%s2] sm:$0x1]
        %v348 = vlaneseq
        %v349 = vshrl.u32 %v348, 7
        %v350 = vsub.s32 0, %v349
        %v351 = vrot.slane %v346, %v350
        %v356 = vunpack.c.l.b16 %v343
        %v357 = vunpack.c.l.b16 %v344
        %v358 = vunpack.c.l.b16 %v345
        %v359 = vpack.c.b16 %v357, %v356
        %v360 = vpack.c.b16 %v358, %v358
        %vm362 = vcmask 179200
        %v364 = vsel %vm362, %v311, 0
        %v367 = vsel %vm362, %v312, 0
        %v370 = vsel %vm362, %v313, 0
        %v373 = vsel %vm362, %v314, 0
        %v376 = vsel %vm362, %v315, 0
        %v379 = vsel %vm362, %v316, 0
        %v382 = vsel %vm362, %v317, 0
        %v385 = vsel %vm362, %v318, 0
        %v388 = vsel %vm362, %v319, 0
        %v391 = vsel %vm362, %v320, 0
        %v394 = vsel %vm362, %v321, 0
        %v397 = vsel %vm362, %v322, 0
        %v400 = vsel %vm362, %v323, 0
        %v403 = vsel %vm362, %v324, 0
        %v406 = vsel %vm362, %v325, 0
        %v409 = vsel %vm362, %v326, 0
        %v412 = vsel %vm362, %v327, 0
        %v415 = vsel %vm362, %v328, 0
        %v418 = vsel %vm362, %v329, 0
        %v421 = vsel %vm362, %v330, 0
        %v424 = vsel %vm362, %v331, 0
        %v427 = vsel %vm362, %v332, 0
        %v430 = vsel %vm362, %v333, 0
        %v433 = vsel %vm362, %v334, 0
        %v436 = vsel %vm362, %v335, 0
        %v439 = vsel %vm362, %v336, 0
        %v442 = vsel %vm362, %v337, 0
        %v445 = vsel %vm362, %v338, 0
        %v448 = vsel %vm362, %v339, 0
        %v451 = vsel %vm362, %v340, 0
        %v454 = vsel %vm362, %v341, 0
        %v457 = vsel %vm362, %v342, 0
        %vm459 = vcmask 1042432
        %v461 = vsel %vm459, %v360, 0
        %463 = vmatprep.subr.bf16.mxu0 0
        %464 = vmatpush1.bf16.msra.mxu0 %v359
        %465 = vmatprep.subr.bf16.mxu0 0
        %466 = vmatpush1.bf16.msra.mxu0 %v461
        %467 = vmatprep.subr.bf16.mxu0 0
        %468 = vmatpush1.bf16.msra.mxu0 0
        %469 = vmatprep.subr.bf16.mxu0 0
        %470 = vmatpush1.bf16.msra.mxu0 0
        %471 = vmatprep.subr.bf16.mxu0 0
        %472 = vmatpush1.bf16.msra.mxu0 0
        %473 = vmatprep.subr.bf16.mxu0 0
        %474 = vmatpush1.bf16.msra.mxu0 0
        %475 = vmatprep.subr.bf16.mxu0 0
        %476 = vmatpush1.bf16.msra.mxu0 0
        %477 = vmatprep.subr.bf16.mxu0 0
        %478 = vmatpush1.bf16.msra.mxu0 0
        %479 = vmatprep.subr.bf16.mxu0 0
        %480 = vmatpush1.bf16.msra.mxu0 0
        %481 = vmatprep.subr.bf16.mxu0 0
        %482 = vmatpush1.bf16.msra.mxu0 0
        %483 = vmatprep.subr.bf16.mxu0 0
        %484 = vmatpush1.bf16.msra.mxu0 0
        %485 = vmatprep.subr.bf16.mxu0 0
        %486 = vmatpush1.bf16.msra.mxu0 0
        %487 = vmatprep.subr.bf16.mxu0 0
        %488 = vmatpush1.bf16.msra.mxu0 0
        %489 = vmatprep.subr.bf16.mxu0 0
        %490 = vmatpush1.bf16.msra.mxu0 0
        %491 = vmatprep.subr.bf16.mxu0 0
        %492 = vmatpush1.bf16.msra.mxu0 0
        %493 = vmatprep.subr.bf16.mxu0 0
        %494 = vmatpush1.bf16.msra.mxu0 0
        %495 = vmatprep.mubr.bf16.mxu0 0
        %496 = vmatmul.mubr.bf16.gmra.mrb[0].mxu0 %v364
        %v497 = vpop.f32.mrb[0].mxu0
        %v498 = vadd.f32 %v351, %v497
        %v499 = vpop.f32.mrb[0].mxu0
        %v500 = vpop.f32.mrb[0].mxu0
        %v501 = vadd.f32 %v351, %v500
        %v502 = vpop.f32.mrb[0].mxu0
        %503 = vmatprep.mubr.bf16.mxu0 0
        %504 = vmatmul.mubr.bf16.gmra.mrb[0].mxu0 %v367
        %v505 = vpop.f32.mrb[0].mxu0
        %v506 = vadd.f32 %v351, %v505
        %v507 = vpop.f32.mrb[0].mxu0
        %v508 = vpop.f32.mrb[0].mxu0
        %v509 = vadd.f32 %v351, %v508
        %v510 = vpop.f32.mrb[0].mxu0
        %511 = vmatprep.mubr.bf16.mxu0 0
        %512 = vmatmul.mubr.bf16.gmra.mrb[0].mxu0 %v370
        %v513 = vpop.f32.mrb[0].mxu0
        %v514 = vadd.f32 %v351, %v513
        %v515 = vpop.f32.mrb[0].mxu0
        %v516 = vpop.f32.mrb[0].mxu0
        %v517 = vadd.f32 %v351, %v516
        %v518 = vpop.f32.mrb[0].mxu0
        %519 = vmatprep.mubr.bf16.mxu0 0
        %520 = vmatmul.mubr.bf16.gmra.mrb[0].mxu0 %v373
        %v521 = vpop.f32.mrb[0].mxu0
        %v522 = vadd.f32 %v351, %v521
        %v523 = vpop.f32.mrb[0].mxu0
        %v524 = vpop.f32.mrb[0].mxu0
        %v525 = vadd.f32 %v351, %v524
        %v526 = vpop.f32.mrb[0].mxu0
        %527 = vmatprep.mubr.bf16.mxu0 0
        %528 = vmatmul.mubr.bf16.gmra.mrb[0].mxu0 %v376
        %v529 = vpop.f32.mrb[0].mxu0
        %v530 = vadd.f32 %v351, %v529
        %v531 = vpop.f32.mrb[0].mxu0
        %v532 = vpop.f32.mrb[0].mxu0
        %v533 = vadd.f32 %v351, %v532
        %v534 = vpop.f32.mrb[0].mxu0
        %535 = vmatprep.mubr.bf16.mxu0 0
        %536 = vmatmul.mubr.bf16.gmra.mrb[0].mxu0 %v379
        %v537 = vpop.f32.mrb[0].mxu0
        %v538 = vadd.f32 %v351, %v537
        %v539 = vpop.f32.mrb[0].mxu0
        %v540 = vpop.f32.mrb[0].mxu0
        %v541 = vadd.f32 %v351, %v540
        %v542 = vpop.f32.mrb[0].mxu0
        %543 = vmatprep.mubr.bf16.mxu0 0
        %544 = vmatmul.mubr.bf16.gmra.mrb[0].mxu0 %v382
        %v545 = vpop.f32.mrb[0].mxu0
        %v546 = vadd.f32 %v351, %v545
        %v547 = vpop.f32.mrb[0].mxu0
        %v548 = vpop.f32.mrb[0].mxu0
        %v549 = vadd.f32 %v351, %v548
        %v550 = vpop.f32.mrb[0].mxu0
        %551 = vmatprep.mubr.bf16.mxu0 0
        %552 = vmatmul.mubr.bf16.gmra.mrb[0].mxu0 %v385
        %v553 = vpop.f32.mrb[0].mxu0
        %v554 = vadd.f32 %v351, %v553
        %v555 = vpop.f32.mrb[0].mxu0
        %v556 = vpop.f32.mrb[0].mxu0
        %v557 = vadd.f32 %v351, %v556
        %v558 = vpop.f32.mrb[0].mxu0
        %559 = vmatprep.mubr.bf16.mxu0 0
        %560 = vmatmul.mubr.bf16.gmra.mrb[0].mxu0 %v388
        %v561 = vpop.f32.mrb[0].mxu0
        %v562 = vadd.f32 %v351, %v561
        %v563 = vpop.f32.mrb[0].mxu0
        %v564 = vpop.f32.mrb[0].mxu0
        %v565 = vadd.f32 %v351, %v564
        %v566 = vpop.f32.mrb[0].mxu0
        %567 = vmatprep.mubr.bf16.mxu0 0
        %568 = vmatmul.mubr.bf16.gmra.mrb[0].mxu0 %v391
        %v569 = vpop.f32.mrb[0].mxu0
        %v570 = vadd.f32 %v351, %v569
        %v571 = vpop.f32.mrb[0].mxu0
        %v572 = vpop.f32.mrb[0].mxu0
        %v573 = vadd.f32 %v351, %v572
        %v574 = vpop.f32.mrb[0].mxu0
        %575 = vmatprep.mubr.bf16.mxu0 0
        %576 = vmatmul.mubr.bf16.gmra.mrb[0].mxu0 %v394
        %v577 = vpop.f32.mrb[0].mxu0
        %v578 = vadd.f32 %v351, %v577
        %v579 = vpop.f32.mrb[0].mxu0
        %v580 = vpop.f32.mrb[0].mxu0
        %v581 = vadd.f32 %v351, %v580
        %v582 = vpop.f32.mrb[0].mxu0
        %583 = vmatprep.mubr.bf16.mxu0 0
        %584 = vmatmul.mubr.bf16.gmra.mrb[0].mxu0 %v397
        %v585 = vpop.f32.mrb[0].mxu0
        %v586 = vadd.f32 %v351, %v585
        %v587 = vpop.f32.mrb[0].mxu0
        %v588 = vpop.f32.mrb[0].mxu0
        %v589 = vadd.f32 %v351, %v588
        %v590 = vpop.f32.mrb[0].mxu0
        %591 = vmatprep.mubr.bf16.mxu0 0
        %592 = vmatmul.mubr.bf16.gmra.mrb[0].mxu0 %v400
        %v593 = vpop.f32.mrb[0].mxu0
        %v594 = vadd.f32 %v351, %v593
        %v595 = vpop.f32.mrb[0].mxu0
        %v596 = vpop.f32.mrb[0].mxu0
        %v597 = vadd.f32 %v351, %v596
        %v598 = vpop.f32.mrb[0].mxu0
        %599 = vmatprep.mubr.bf16.mxu0 0
        %600 = vmatmul.mubr.bf16.gmra.mrb[0].mxu0 %v403
        %v601 = vpop.f32.mrb[0].mxu0
        %v602 = vadd.f32 %v351, %v601
        %v603 = vpop.f32.mrb[0].mxu0
        %v604 = vpop.f32.mrb[0].mxu0
        %v605 = vadd.f32 %v351, %v604
        %v606 = vpop.f32.mrb[0].mxu0
        %607 = vmatprep.mubr.bf16.mxu0 0
        %608 = vmatmul.mubr.bf16.gmra.mrb[0].mxu0 %v406
        %v609 = vpop.f32.mrb[0].mxu0
        %v610 = vadd.f32 %v351, %v609
        %v611 = vpop.f32.mrb[0].mxu0
        %v612 = vpop.f32.mrb[0].mxu0
        %v613 = vadd.f32 %v351, %v612
        %v614 = vpop.f32.mrb[0].mxu0
        %615 = vmatprep.mubr.bf16.mxu0 0
        %616 = vmatmul.mubr.bf16.gmra.mrb[0].mxu0 %v409
        %v617 = vpop.f32.mrb[0].mxu0
        %v618 = vadd.f32 %v351, %v617
        %v619 = vpop.f32.mrb[0].mxu0
        %v620 = vpop.f32.mrb[0].mxu0
        %v621 = vadd.f32 %v351, %v620
        %v622 = vpop.f32.mrb[0].mxu0
        %623 = vmatprep.mubr.bf16.mxu0 0
        %624 = vmatmul.mubr.bf16.gmra.mrb[0].mxu0 %v412
        %v625 = vpop.f32.mrb[0].mxu0
        %v626 = vadd.f32 %v351, %v625
        %v627 = vpop.f32.mrb[0].mxu0
        %v628 = vpop.f32.mrb[0].mxu0
        %v629 = vadd.f32 %v351, %v628
        %v630 = vpop.f32.mrb[0].mxu0
        %631 = vmatprep.mubr.bf16.mxu0 0
        %632 = vmatmul.mubr.bf16.gmra.mrb[0].mxu0 %v415
        %v633 = vpop.f32.mrb[0].mxu0
        %v634 = vadd.f32 %v351, %v633
        %v635 = vpop.f32.mrb[0].mxu0
        %v636 = vpop.f32.mrb[0].mxu0
        %v637 = vadd.f32 %v351, %v636
        %v638 = vpop.f32.mrb[0].mxu0
        %639 = vmatprep.mubr.bf16.mxu0 0
        %640 = vmatmul.mubr.bf16.gmra.mrb[0].mxu0 %v418
        %v641 = vpop.f32.mrb[0].mxu0
        %v642 = vadd.f32 %v351, %v641
        %v643 = vpop.f32.mrb[0].mxu0
        %v644 = vpop.f32.mrb[0].mxu0
        %v645 = vadd.f32 %v351, %v644
        %v646 = vpop.f32.mrb[0].mxu0
        %647 = vmatprep.mubr.bf16.mxu0 0
        %648 = vmatmul.mubr.bf16.gmra.mrb[0].mxu0 %v421
        %v649 = vpop.f32.mrb[0].mxu0
        %v650 = vadd.f32 %v351, %v649
        %v651 = vpop.f32.mrb[0].mxu0
        %v652 = vpop.f32.mrb[0].mxu0
        %v653 = vadd.f32 %v351, %v652
        %v654 = vpop.f32.mrb[0].mxu0
        %655 = vmatprep.mubr.bf16.mxu0 0
        %656 = vmatmul.mubr.bf16.gmra.mrb[0].mxu0 %v424
        %v657 = vpop.f32.mrb[0].mxu0
        %v658 = vadd.f32 %v351, %v657
        %v659 = vpop.f32.mrb[0].mxu0
        %v660 = vpop.f32.mrb[0].mxu0
        %v661 = vadd.f32 %v351, %v660
        %v662 = vpop.f32.mrb[0].mxu0
        %663 = vmatprep.mubr.bf16.mxu0 0
        %664 = vmatmul.mubr.bf16.gmra.mrb[0].mxu0 %v427
        %v665 = vpop.f32.mrb[0].mxu0
        %v666 = vadd.f32 %v351, %v665
        %v667 = vpop.f32.mrb[0].mxu0
        %v668 = vpop.f32.mrb[0].mxu0
        %v669 = vadd.f32 %v351, %v668
        %v670 = vpop.f32.mrb[0].mxu0
        %671 = vmatprep.mubr.bf16.mxu0 0
        %672 = vmatmul.mubr.bf16.gmra.mrb[0].mxu0 %v430
        %v673 = vpop.f32.mrb[0].mxu0
        %v674 = vadd.f32 %v351, %v673
        %v675 = vpop.f32.mrb[0].mxu0
        %v676 = vpop.f32.mrb[0].mxu0
        %v677 = vadd.f32 %v351, %v676
        %v678 = vpop.f32.mrb[0].mxu0
        %679 = vmatprep.mubr.bf16.mxu0 0
        %680 = vmatmul.mubr.bf16.gmra.mrb[0].mxu0 %v433
        %v681 = vpop.f32.mrb[0].mxu0
        %v682 = vadd.f32 %v351, %v681
        %v683 = vpop.f32.mrb[0].mxu0
        %v684 = vpop.f32.mrb[0].mxu0
        %v685 = vadd.f32 %v351, %v684
        %v686 = vpop.f32.mrb[0].mxu0
        %687 = vmatprep.mubr.bf16.mxu0 0
        %688 = vmatmul.mubr.bf16.gmra.mrb[0].mxu0 %v436
        %v689 = vpop.f32.mrb[0].mxu0
        %v690 = vadd.f32 %v351, %v689
        %v691 = vpop.f32.mrb[0].mxu0
        %v692 = vpop.f32.mrb[0].mxu0
        %v693 = vadd.f32 %v351, %v692
        %v694 = vpop.f32.mrb[0].mxu0
        %695 = vmatprep.mubr.bf16.mxu0 0
        %696 = vmatmul.mubr.bf16.gmra.mrb[0].mxu0 %v439
        %v697 = vpop.f32.mrb[0].mxu0
        %v698 = vadd.f32 %v351, %v697
        %v699 = vpop.f32.mrb[0].mxu0
        %v700 = vpop.f32.mrb[0].mxu0
        %v701 = vadd.f32 %v351, %v700
        %v702 = vpop.f32.mrb[0].mxu0
        %703 = vmatprep.mubr.bf16.mxu0 0
        %704 = vmatmul.mubr.bf16.gmra.mrb[0].mxu0 %v442
        %v705 = vpop.f32.mrb[0].mxu0
        %v706 = vadd.f32 %v351, %v705
        %v707 = vpop.f32.mrb[0].mxu0
        %v708 = vpop.f32.mrb[0].mxu0
        %v709 = vadd.f32 %v351, %v708
        %v710 = vpop.f32.mrb[0].mxu0
        %711 = vmatprep.mubr.bf16.mxu0 0
        %712 = vmatmul.mubr.bf16.gmra.mrb[0].mxu0 %v445
        %v713 = vpop.f32.mrb[0].mxu0
        %v714 = vadd.f32 %v351, %v713
        %v715 = vpop.f32.mrb[0].mxu0
        %v716 = vpop.f32.mrb[0].mxu0
        %v717 = vadd.f32 %v351, %v716
        %v718 = vpop.f32.mrb[0].mxu0
        %719 = vmatprep.mubr.bf16.mxu0 0
        %720 = vmatmul.mubr.bf16.gmra.mrb[0].mxu0 %v448
        %v721 = vpop.f32.mrb[0].mxu0
        %v722 = vadd.f32 %v351, %v721
        %v723 = vpop.f32.mrb[0].mxu0
        %v724 = vpop.f32.mrb[0].mxu0
        %v725 = vadd.f32 %v351, %v724
        %v726 = vpop.f32.mrb[0].mxu0
        %727 = vmatprep.mubr.bf16.mxu0 0
        %728 = vmatmul.mubr.bf16.gmra.mrb[0].mxu0 %v451
        %v729 = vpop.f32.mrb[0].mxu0
        %v730 = vadd.f32 %v351, %v729
        %v731 = vpop.f32.mrb[0].mxu0
        %v732 = vpop.f32.mrb[0].mxu0
        %v733 = vadd.f32 %v351, %v732
        %v734 = vpop.f32.mrb[0].mxu0
        %735 = vmatprep.mubr.bf16.mxu0 0
        %736 = vmatmul.mubr.bf16.gmra.mrb[0].mxu0 %v454
        %v737 = vpop.f32.mrb[0].mxu0
        %v738 = vadd.f32 %v351, %v737
        %v739 = vpop.f32.mrb[0].mxu0
        %v740 = vpop.f32.mrb[0].mxu0
        %v741 = vadd.f32 %v351, %v740
        %v742 = vpop.f32.mrb[0].mxu0
        %743 = vmatprep.mubr.bf16.mxu0 0
        %744 = vmatmul.mubr.bf16.gmra.mrb[0].mxu0 %v457
        %v745 = vpop.f32.mrb[0].mxu0
        %v746 = vadd.f32 %v351, %v745
        %v747 = vpop.f32.mrb[0].mxu0
        %v748 = vpop.f32.mrb[0].mxu0
        %v749 = vadd.f32 %v351, %v748
        %v750 = vpop.f32.mrb[0].mxu0
        %751 = vdwg.mxu0
        %v752 = vmax.f32 %v498, 0.0
        %v753 = vmax.f32 %v501, 0.0
        %v754 = vmax.f32 %v506, 0.0
        %v755 = vmax.f32 %v509, 0.0
        %v756 = vmax.f32 %v514, 0.0
        %v757 = vmax.f32 %v517, 0.0
        %v758 = vmax.f32 %v522, 0.0
        %v759 = vmax.f32 %v525, 0.0
        %v760 = vmax.f32 %v530, 0.0
        %v761 = vmax.f32 %v533, 0.0
        %v762 = vmax.f32 %v538, 0.0
        %v763 = vmax.f32 %v541, 0.0
        %v764 = vmax.f32 %v546, 0.0
        %v765 = vmax.f32 %v549, 0.0
        %v766 = vmax.f32 %v554, 0.0
        %v767 = vmax.f32 %v557, 0.0
        %v768 = vmax.f32 %v562, 0.0
        %v769 = vmax.f32 %v565, 0.0
        %v770 = vmax.f32 %v570, 0.0
        %v771 = vmax.f32 %v573, 0.0
        %v772 = vmax.f32 %v578, 0.0
        %v773 = vmax.f32 %v581, 0.0
        %v774 = vmax.f32 %v586, 0.0
        %v775 = vmax.f32 %v589, 0.0
        %v776 = vmax.f32 %v594, 0.0
        %v777 = vmax.f32 %v597, 0.0
        %v778 = vmax.f32 %v602, 0.0
        %v779 = vmax.f32 %v605, 0.0
        %v780 = vmax.f32 %v610, 0.0
        %v781 = vmax.f32 %v613, 0.0
        %v782 = vmax.f32 %v618, 0.0
        %v783 = vmax.f32 %v621, 0.0
        %v784 = vmax.f32 %v626, 0.0
        %v785 = vmax.f32 %v629, 0.0
        %v786 = vmax.f32 %v634, 0.0
        %v787 = vmax.f32 %v637, 0.0
        %v788 = vmax.f32 %v642, 0.0
        %v789 = vmax.f32 %v645, 0.0
        %v790 = vmax.f32 %v650, 0.0
        %v791 = vmax.f32 %v653, 0.0
        %v792 = vmax.f32 %v658, 0.0
        %v793 = vmax.f32 %v661, 0.0
        %v794 = vmax.f32 %v666, 0.0
        %v795 = vmax.f32 %v669, 0.0
        %v796 = vmax.f32 %v674, 0.0
        %v797 = vmax.f32 %v677, 0.0
        %v798 = vmax.f32 %v682, 0.0
        %v799 = vmax.f32 %v685, 0.0
        %v800 = vmax.f32 %v690, 0.0
        %v801 = vmax.f32 %v693, 0.0
        %v802 = vmax.f32 %v698, 0.0
        %v803 = vmax.f32 %v701, 0.0
        %v804 = vmax.f32 %v706, 0.0
        %v805 = vmax.f32 %v709, 0.0
        %v806 = vmax.f32 %v714, 0.0
        %v807 = vmax.f32 %v717, 0.0
        %v808 = vmax.f32 %v722, 0.0
        %v809 = vmax.f32 %v725, 0.0
        %v810 = vmax.f32 %v730, 0.0
        %v811 = vmax.f32 %v733, 0.0
        %v812 = vmax.f32 %v738, 0.0
        %v813 = vmax.f32 %v741, 0.0
        %v814 = vmax.f32 %v746, 0.0
        %v815 = vmax.f32 %v749, 0.0
        %v816 = vpack.c.bf16 %v753, %v752
        %v817 = vpack.c.bf16 %v755, %v754
        %v818 = vpack.c.bf16 %v757, %v756
        %v819 = vpack.c.bf16 %v759, %v758
        %v820 = vpack.c.bf16 %v761, %v760
        %v821 = vpack.c.bf16 %v763, %v762
        %v822 = vpack.c.bf16 %v765, %v764
        %v823 = vpack.c.bf16 %v767, %v766
        %v824 = vpack.c.bf16 %v769, %v768
        %v825 = vpack.c.bf16 %v771, %v770
        %v826 = vpack.c.bf16 %v773, %v772
        %v827 = vpack.c.bf16 %v775, %v774
        %v828 = vpack.c.bf16 %v777, %v776
        %v829 = vpack.c.bf16 %v779, %v778
        %v830 = vpack.c.bf16 %v781, %v780
        %v831 = vpack.c.bf16 %v783, %v782
        %v832 = vpack.c.bf16 %v785, %v784
        %v833 = vpack.c.bf16 %v787, %v786
        %v834 = vpack.c.bf16 %v789, %v788
        %v835 = vpack.c.bf16 %v791, %v790
        %v836 = vpack.c.bf16 %v793, %v792
        %v837 = vpack.c.bf16 %v795, %v794
        %v838 = vpack.c.bf16 %v797, %v796
        %v839 = vpack.c.bf16 %v799, %v798
        %v840 = vpack.c.bf16 %v801, %v800
        %v841 = vpack.c.bf16 %v803, %v802
        %v842 = vpack.c.bf16 %v805, %v804
        %v843 = vpack.c.bf16 %v807, %v806
        %v844 = vpack.c.bf16 %v809, %v808
        %v845 = vpack.c.bf16 %v811, %v810
        %v846 = vpack.c.bf16 %v813, %v812
        %v847 = vpack.c.bf16 %v815, %v814
        %v848 = vld [vmem:[%s3] sm:$0xf]
        %v849 = vld [vmem:[%s3 + $0x4] sm:$0xf]
        %v850 = vld [vmem:[%s3 + $0x8] sm:$0xf]
        %v851 = vld [vmem:[%s3 + $0xc] sm:$0xf]
        %v852 = vld [vmem:[%s3 + $0x10] sm:$0xf]
        %v853 = vld [vmem:[%s3 + $0x14] sm:$0xf]
        %v854 = vld [vmem:[%s3 + $0x18] sm:$0xf]
        %v855 = vld [vmem:[%s3 + $0x1c] sm:$0xf]
        %v856 = vld [vmem:[%s3 + $0x20] sm:$0xf]
        %v857 = vld [vmem:[%s3 + $0x24] sm:$0xf]
        %v858 = vld [vmem:[%s3 + $0x28] sm:$0xf]
        %v859 = vld [vmem:[%s3 + $0x2c] sm:$0xf]
        %v860 = vld [vmem:[%s3 + $0x30] sm:$0xf]
        %v861 = vld [vmem:[%s3 + $0x34] sm:$0xf]
        %v862 = vld [vmem:[%s3 + $0x38] sm:$0xf]
        %v863 = vld [vmem:[%s3 + $0x3c] sm:$0xf]
        %v864 = vld [vmem:[%s4] sm:$0x1]
        %v866 = vlaneseq
        %v867 = vshrl.u32 %v866, 7
        %v868 = vsub.s32 0, %v867
        %v869 = vrot.slane %v864, %v868
        %v887 = vunpack.c.l.b16 %v848
        %v888 = vunpack.c.l.b16 %v849
        %v889 = vunpack.c.l.b16 %v850
        %v890 = vunpack.c.l.b16 %v851
        %v891 = vunpack.c.l.b16 %v852
        %v892 = vunpack.c.l.b16 %v853
        %v893 = vunpack.c.l.b16 %v854
        %v894 = vunpack.c.l.b16 %v855
        %v895 = vunpack.c.l.b16 %v856
        %v896 = vunpack.c.l.b16 %v857
        %v897 = vunpack.c.l.b16 %v858
        %v898 = vunpack.c.l.b16 %v859
        %v899 = vunpack.c.l.b16 %v860
        %v900 = vunpack.c.l.b16 %v861
        %v901 = vunpack.c.l.b16 %v862
        %v902 = vunpack.c.l.b16 %v863
        %v903 = vpack.c.b16 %v888, %v887
        %v904 = vpack.c.b16 %v890, %v889
        %v905 = vpack.c.b16 %v892, %v891
        %v906 = vpack.c.b16 %v894, %v893
        %v907 = vpack.c.b16 %v896, %v895
        %v908 = vpack.c.b16 %v898, %v897
        %v909 = vpack.c.b16 %v900, %v899
        %v910 = vpack.c.b16 %v902, %v901
        %919 = vmatprep.subr.bf16.mxu0 0
        %920 = vmatpush1.bf16.msra.mxu0 %v903
        %921 = vmatprep.subr.bf16.mxu0 0
        %922 = vmatpush1.bf16.msra.mxu0 %v904
        %923 = vmatprep.subr.bf16.mxu0 0
        %924 = vmatpush1.bf16.msra.mxu0 %v905
        %925 = vmatprep.subr.bf16.mxu0 0
        %926 = vmatpush1.bf16.msra.mxu0 %v906
        %927 = vmatprep.subr.bf16.mxu0 0
        %928 = vmatpush1.bf16.msra.mxu0 %v907
        %929 = vmatprep.subr.bf16.mxu0 0
        %930 = vmatpush1.bf16.msra.mxu0 %v908
        %931 = vmatprep.subr.bf16.mxu0 0
        %932 = vmatpush1.bf16.msra.mxu0 %v909
        %933 = vmatprep.subr.bf16.mxu0 0
        %934 = vmatpush1.bf16.msra.mxu0 %v910
        %935 = vmatprep.subr.bf16.mxu0 0
        %936 = vmatpush1.bf16.msra.mxu0 0
        %937 = vmatprep.subr.bf16.mxu0 0
        %938 = vmatpush1.bf16.msra.mxu0 0
        %939 = vmatprep.subr.bf16.mxu0 0
        %940 = vmatpush1.bf16.msra.mxu0 0
        %941 = vmatprep.subr.bf16.mxu0 0
        %942 = vmatpush1.bf16.msra.mxu0 0
        %943 = vmatprep.subr.bf16.mxu0 0
        %944 = vmatpush1.bf16.msra.mxu0 0
        %945 = vmatprep.subr.bf16.mxu0 0
        %946 = vmatpush1.bf16.msra.mxu0 0
        %947 = vmatprep.subr.bf16.mxu0 0
        %948 = vmatpush1.bf16.msra.mxu0 0
        %949 = vmatprep.subr.bf16.mxu0 0
        %950 = vmatpush1.bf16.msra.mxu0 0
        %951 = vmatprep.mubr.bf16.mxu0 0
        %952 = vmatmul.mubr.bf16.gmra.mrb[0].mxu0 %v816
        %v953 = vpop.f32.mrb[0].mxu0
        %v954 = vadd.f32 %v869, %v953
        %v955 = vpop.f32.mrb[0].mxu0
        %v956 = vpop.f32.mrb[0].mxu0
        %v957 = vadd.f32 %v869, %v956
        %v958 = vpop.f32.mrb[0].mxu0
        %959 = vmatprep.mubr.bf16.mxu0 0
        %960 = vmatmul.mubr.bf16.gmra.mrb[0].mxu0 %v817
        %v961 = vpop.f32.mrb[0].mxu0
        %v962 = vadd.f32 %v869, %v961
        %v963 = vpop.f32.mrb[0].mxu0
        %v964 = vpop.f32.mrb[0].mxu0
        %v965 = vadd.f32 %v869, %v964
        %v966 = vpop.f32.mrb[0].mxu0
        %967 = vmatprep.mubr.bf16.mxu0 0
        %968 = vmatmul.mubr.bf16.gmra.mrb[0].mxu0 %v818
        %v969 = vpop.f32.mrb[0].mxu0
        %v970 = vadd.f32 %v869, %v969
        %v971 = vpop.f32.mrb[0].mxu0
        %v972 = vpop.f32.mrb[0].mxu0
        %v973 = vadd.f32 %v869, %v972
        %v974 = vpop.f32.mrb[0].mxu0
        %975 = vmatprep.mubr.bf16.mxu0 0
        %976 = vmatmul.mubr.bf16.gmra.mrb[0].mxu0 %v819
        %v977 = vpop.f32.mrb[0].mxu0
        %v978 = vadd.f32 %v869, %v977
        %v979 = vpop.f32.mrb[0].mxu0
        %v980 = vpop.f32.mrb[0].mxu0
        %v981 = vadd.f32 %v869, %v980
        %v982 = vpop.f32.mrb[0].mxu0
        %983 = vmatprep.mubr.bf16.mxu0 0
        %984 = vmatmul.mubr.bf16.gmra.mrb[0].mxu0 %v820
        %v985 = vpop.f32.mrb[0].mxu0
        %v986 = vadd.f32 %v869, %v985
        %v987 = vpop.f32.mrb[0].mxu0
        %v988 = vpop.f32.mrb[0].mxu0
        %v989 = vadd.f32 %v869, %v988
        %v990 = vpop.f32.mrb[0].mxu0
        %991 = vmatprep.mubr.bf16.mxu0 0
        %992 = vmatmul.mubr.bf16.gmra.mrb[0].mxu0 %v821
        %v993 = vpop.f32.mrb[0].mxu0
        %v994 = vadd.f32 %v869, %v993
        %v995 = vpop.f32.mrb[0].mxu0
        %v996 = vpop.f32.mrb[0].mxu0
        %v997 = vadd.f32 %v869, %v996
        %v998 = vpop.f32.mrb[0].mxu0
        %999 = vmatprep.mubr.bf16.mxu0 0
        %1000 = vmatmul.mubr.bf16.gmra.mrb[0].mxu0 %v822
        %v1001 = vpop.f32.mrb[0].mxu0
        %v1002 = vadd.f32 %v869, %v1001
        %v1003 = vpop.f32.mrb[0].mxu0
        %v1004 = vpop.f32.mrb[0].mxu0
        %v1005 = vadd.f32 %v869, %v1004
        %v1006 = vpop.f32.mrb[0].mxu0
        %1007 = vmatprep.mubr.bf16.mxu0 0
        %1008 = vmatmul.mubr.bf16.gmra.mrb[0].mxu0 %v823
        %v1009 = vpop.f32.mrb[0].mxu0
        %v1010 = vadd.f32 %v869, %v1009
        %v1011 = vpop.f32.mrb[0].mxu0
        %v1012 = vpop.f32.mrb[0].mxu0
        %v1013 = vadd.f32 %v869, %v1012
        %v1014 = vpop.f32.mrb[0].mxu0
        %1015 = vmatprep.mubr.bf16.mxu0 0
        %1016 = vmatmul.mubr.bf16.gmra.mrb[0].mxu0 %v824
        %v1017 = vpop.f32.mrb[0].mxu0
        %v1018 = vadd.f32 %v869, %v1017
        %v1019 = vpop.f32.mrb[0].mxu0
        %v1020 = vpop.f32.mrb[0].mxu0
        %v1021 = vadd.f32 %v869, %v1020
        %v1022 = vpop.f32.mrb[0].mxu0
        %1023 = vmatprep.mubr.bf16.mxu0 0
        %1024 = vmatmul.mubr.bf16.gmra.mrb[0].mxu0 %v825
        %v1025 = vpop.f32.mrb[0].mxu0
        %v1026 = vadd.f32 %v869, %v1025
        %v1027 = vpop.f32.mrb[0].mxu0
        %v1028 = vpop.f32.mrb[0].mxu0
        %v1029 = vadd.f32 %v869, %v1028
        %v1030 = vpop.f32.mrb[0].mxu0
        %1031 = vmatprep.mubr.bf16.mxu0 0
        %1032 = vmatmul.mubr.bf16.gmra.mrb[0].mxu0 %v826
        %v1033 = vpop.f32.mrb[0].mxu0
        %v1034 = vadd.f32 %v869, %v1033
        %v1035 = vpop.f32.mrb[0].mxu0
        %v1036 = vpop.f32.mrb[0].mxu0
        %v1037 = vadd.f32 %v869, %v1036
        %v1038 = vpop.f32.mrb[0].mxu0
        %1039 = vmatprep.mubr.bf16.mxu0 0
        %1040 = vmatmul.mubr.bf16.gmra.mrb[0].mxu0 %v827
        %v1041 = vpop.f32.mrb[0].mxu0
        %v1042 = vadd.f32 %v869, %v1041
        %v1043 = vpop.f32.mrb[0].mxu0
        %v1044 = vpop.f32.mrb[0].mxu0
        %v1045 = vadd.f32 %v869, %v1044
        %v1046 = vpop.f32.mrb[0].mxu0
        %1047 = vmatprep.mubr.bf16.mxu0 0
        %1048 = vmatmul.mubr.bf16.gmra.mrb[0].mxu0 %v828
        %v1049 = vpop.f32.mrb[0].mxu0
        %v1050 = vadd.f32 %v869, %v1049
        %v1051 = vpop.f32.mrb[0].mxu0
        %v1052 = vpop.f32.mrb[0].mxu0
        %v1053 = vadd.f32 %v869, %v1052
        %v1054 = vpop.f32.mrb[0].mxu0
        %1055 = vmatprep.mubr.bf16.mxu0 0
        %1056 = vmatmul.mubr.bf16.gmra.mrb[0].mxu0 %v829
        %v1057 = vpop.f32.mrb[0].mxu0
        %v1058 = vadd.f32 %v869, %v1057
        %v1059 = vpop.f32.mrb[0].mxu0
        %v1060 = vpop.f32.mrb[0].mxu0
        %v1061 = vadd.f32 %v869, %v1060
        %v1062 = vpop.f32.mrb[0].mxu0
        %1063 = vmatprep.mubr.bf16.mxu0 0
        %1064 = vmatmul.mubr.bf16.gmra.mrb[0].mxu0 %v830
        %v1065 = vpop.f32.mrb[0].mxu0
        %v1066 = vadd.f32 %v869, %v1065
        %v1067 = vpop.f32.mrb[0].mxu0
        %v1068 = vpop.f32.mrb[0].mxu0
        %v1069 = vadd.f32 %v869, %v1068
        %v1070 = vpop.f32.mrb[0].mxu0
        %1071 = vmatprep.mubr.bf16.mxu0 0
        %1072 = vmatmul.mubr.bf16.gmra.mrb[0].mxu0 %v831
        %v1073 = vpop.f32.mrb[0].mxu0
        %v1074 = vadd.f32 %v869, %v1073
        %v1075 = vpop.f32.mrb[0].mxu0
        %v1076 = vpop.f32.mrb[0].mxu0
        %v1077 = vadd.f32 %v869, %v1076
        %v1078 = vpop.f32.mrb[0].mxu0
        %1079 = vmatprep.mubr.bf16.mxu0 0
        %1080 = vmatmul.mubr.bf16.gmra.mrb[0].mxu0 %v832
        %v1081 = vpop.f32.mrb[0].mxu0
        %v1082 = vadd.f32 %v869, %v1081
        %v1083 = vpop.f32.mrb[0].mxu0
        %v1084 = vpop.f32.mrb[0].mxu0
        %v1085 = vadd.f32 %v869, %v1084
        %v1086 = vpop.f32.mrb[0].mxu0
        %1087 = vmatprep.mubr.bf16.mxu0 0
        %1088 = vmatmul.mubr.bf16.gmra.mrb[0].mxu0 %v833
        %v1089 = vpop.f32.mrb[0].mxu0
        %v1090 = vadd.f32 %v869, %v1089
        %v1091 = vpop.f32.mrb[0].mxu0
        %v1092 = vpop.f32.mrb[0].mxu0
        %v1093 = vadd.f32 %v869, %v1092
        %v1094 = vpop.f32.mrb[0].mxu0
        %1095 = vmatprep.mubr.bf16.mxu0 0
        %1096 = vmatmul.mubr.bf16.gmra.mrb[0].mxu0 %v834
        %v1097 = vpop.f32.mrb[0].mxu0
        %v1098 = vadd.f32 %v869, %v1097
        %v1099 = vpop.f32.mrb[0].mxu0
        %v1100 = vpop.f32.mrb[0].mxu0
        %v1101 = vadd.f32 %v869, %v1100
        %v1102 = vpop.f32.mrb[0].mxu0
        %1103 = vmatprep.mubr.bf16.mxu0 0
        %1104 = vmatmul.mubr.bf16.gmra.mrb[0].mxu0 %v835
        %v1105 = vpop.f32.mrb[0].mxu0
        %v1106 = vadd.f32 %v869, %v1105
        %v1107 = vpop.f32.mrb[0].mxu0
        %v1108 = vpop.f32.mrb[0].mxu0
        %v1109 = vadd.f32 %v869, %v1108
        %v1110 = vpop.f32.mrb[0].mxu0
        %1111 = vmatprep.mubr.bf16.mxu0 0
        %1112 = vmatmul.mubr.bf16.gmra.mrb[0].mxu0 %v836
        %v1113 = vpop.f32.mrb[0].mxu0
        %v1114 = vadd.f32 %v869, %v1113
        %v1115 = vpop.f32.mrb[0].mxu0
        %v1116 = vpop.f32.mrb[0].mxu0
        %v1117 = vadd.f32 %v869, %v1116
        %v1118 = vpop.f32.mrb[0].mxu0
        %1119 = vmatprep.mubr.bf16.mxu0 0
        %1120 = vmatmul.mubr.bf16.gmra.mrb[0].mxu0 %v837
        %v1121 = vpop.f32.mrb[0].mxu0
        %v1122 = vadd.f32 %v869, %v1121
        %v1123 = vpop.f32.mrb[0].mxu0
        %v1124 = vpop.f32.mrb[0].mxu0
        %v1125 = vadd.f32 %v869, %v1124
        %v1126 = vpop.f32.mrb[0].mxu0
        %1127 = vmatprep.mubr.bf16.mxu0 0
        %1128 = vmatmul.mubr.bf16.gmra.mrb[0].mxu0 %v838
        %v1129 = vpop.f32.mrb[0].mxu0
        %v1130 = vadd.f32 %v869, %v1129
        %v1131 = vpop.f32.mrb[0].mxu0
        %v1132 = vpop.f32.mrb[0].mxu0
        %v1133 = vadd.f32 %v869, %v1132
        %v1134 = vpop.f32.mrb[0].mxu0
        %1135 = vmatprep.mubr.bf16.mxu0 0
        %1136 = vmatmul.mubr.bf16.gmra.mrb[0].mxu0 %v839
        %v1137 = vpop.f32.mrb[0].mxu0
        %v1138 = vadd.f32 %v869, %v1137
        %v1139 = vpop.f32.mrb[0].mxu0
        %v1140 = vpop.f32.mrb[0].mxu0
        %v1141 = vadd.f32 %v869, %v1140
        %v1142 = vpop.f32.mrb[0].mxu0
        %1143 = vmatprep.mubr.bf16.mxu0 0
        %1144 = vmatmul.mubr.bf16.gmra.mrb[0].mxu0 %v840
        %v1145 = vpop.f32.mrb[0].mxu0
        %v1146 = vadd.f32 %v869, %v1145
        %v1147 = vpop.f32.mrb[0].mxu0
        %v1148 = vpop.f32.mrb[0].mxu0
        %v1149 = vadd.f32 %v869, %v1148
        %v1150 = vpop.f32.mrb[0].mxu0
        %1151 = vmatprep.mubr.bf16.mxu0 0
        %1152 = vmatmul.mubr.bf16.gmra.mrb[0].mxu0 %v841
        %v1153 = vpop.f32.mrb[0].mxu0
        %v1154 = vadd.f32 %v869, %v1153
        %v1155 = vpop.f32.mrb[0].mxu0
        %v1156 = vpop.f32.mrb[0].mxu0
        %v1157 = vadd.f32 %v869, %v1156
        %v1158 = vpop.f32.mrb[0].mxu0
        %1159 = vmatprep.mubr.bf16.mxu0 0
        %1160 = vmatmul.mubr.bf16.gmra.mrb[0].mxu0 %v842
        %v1161 = vpop.f32.mrb[0].mxu0
        %v1162 = vadd.f32 %v869, %v1161
        %v1163 = vpop.f32.mrb[0].mxu0
        %v1164 = vpop.f32.mrb[0].mxu0
        %v1165 = vadd.f32 %v869, %v1164
        %v1166 = vpop.f32.mrb[0].mxu0
        %1167 = vmatprep.mubr.bf16.mxu0 0
        %1168 = vmatmul.mubr.bf16.gmra.mrb[0].mxu0 %v843
        %v1169 = vpop.f32.mrb[0].mxu0
        %v1170 = vadd.f32 %v869, %v1169
        %v1171 = vpop.f32.mrb[0].mxu0
        %v1172 = vpop.f32.mrb[0].mxu0
        %v1173 = vadd.f32 %v869, %v1172
        %v1174 = vpop.f32.mrb[0].mxu0
        %1175 = vmatprep.mubr.bf16.mxu0 0
        %1176 = vmatmul.mubr.bf16.gmra.mrb[0].mxu0 %v844
        %v1177 = vpop.f32.mrb[0].mxu0
        %v1178 = vadd.f32 %v869, %v1177
        %v1179 = vpop.f32.mrb[0].mxu0
        %v1180 = vpop.f32.mrb[0].mxu0
        %v1181 = vadd.f32 %v869, %v1180
        %v1182 = vpop.f32.mrb[0].mxu0
        %1183 = vmatprep.mubr.bf16.mxu0 0
        %1184 = vmatmul.mubr.bf16.gmra.mrb[0].mxu0 %v845
        %v1185 = vpop.f32.mrb[0].mxu0
        %v1186 = vadd.f32 %v869, %v1185
        %v1187 = vpop.f32.mrb[0].mxu0
        %v1188 = vpop.f32.mrb[0].mxu0
        %v1189 = vadd.f32 %v869, %v1188
        %v1190 = vpop.f32.mrb[0].mxu0
        %1191 = vmatprep.mubr.bf16.mxu0 0
        %1192 = vmatmul.mubr.bf16.gmra.mrb[0].mxu0 %v846
        %v1193 = vpop.f32.mrb[0].mxu0
        %v1194 = vadd.f32 %v869, %v1193
        %v1195 = vpop.f32.mrb[0].mxu0
        %v1196 = vpop.f32.mrb[0].mxu0
        %v1197 = vadd.f32 %v869, %v1196
        %v1198 = vpop.f32.mrb[0].mxu0
        %1199 = vmatprep.mubr.bf16.mxu0 0
        %1200 = vmatmul.mubr.bf16.gmra.mrb[0].mxu0 %v847
        %v1201 = vpop.f32.mrb[0].mxu0
        %v1202 = vadd.f32 %v869, %v1201
        %v1203 = vpop.f32.mrb[0].mxu0
        %v1204 = vpop.f32.mrb[0].mxu0
        %v1205 = vadd.f32 %v869, %v1204
        %v1206 = vpop.f32.mrb[0].mxu0
        %1207 = vdwg.mxu0
        %v1208 = vpack.c.bf16 %v957, %v954
        %v1209 = vpack.c.bf16 %v965, %v962
        %v1210 = vpack.c.bf16 %v973, %v970
        %v1211 = vpack.c.bf16 %v981, %v978
        %v1212 = vpack.c.bf16 %v989, %v986
        %v1213 = vpack.c.bf16 %v997, %v994
        %v1214 = vpack.c.bf16 %v1005, %v1002
        %v1215 = vpack.c.bf16 %v1013, %v1010
        %v1216 = vpack.c.bf16 %v1021, %v1018
        %v1217 = vpack.c.bf16 %v1029, %v1026
        %v1218 = vpack.c.bf16 %v1037, %v1034
        %v1219 = vpack.c.bf16 %v1045, %v1042
        %v1220 = vpack.c.bf16 %v1053, %v1050
        %v1221 = vpack.c.bf16 %v1061, %v1058
        %v1222 = vpack.c.bf16 %v1069, %v1066
        %v1223 = vpack.c.bf16 %v1077, %v1074
        %v1224 = vpack.c.bf16 %v1085, %v1082
        %v1225 = vpack.c.bf16 %v1093, %v1090
        %v1226 = vpack.c.bf16 %v1101, %v1098
        %v1227 = vpack.c.bf16 %v1109, %v1106
        %v1228 = vpack.c.bf16 %v1117, %v1114
        %v1229 = vpack.c.bf16 %v1125, %v1122
        %v1230 = vpack.c.bf16 %v1133, %v1130
        %v1231 = vpack.c.bf16 %v1141, %v1138
        %v1232 = vpack.c.bf16 %v1149, %v1146
        %v1233 = vpack.c.bf16 %v1157, %v1154
        %v1234 = vpack.c.bf16 %v1165, %v1162
        %v1235 = vpack.c.bf16 %v1173, %v1170
        %v1236 = vpack.c.bf16 %v1181, %v1178
        %v1237 = vpack.c.bf16 %v1189, %v1186
        %v1238 = vpack.c.bf16 %v1197, %v1194
        %v1239 = vpack.c.bf16 %v1205, %v1202
        %v1272 = vunpack.c.l.b16 %v1208
        %v1273 = vunpack.c.h.b16 %v1208
        %v1274 = vunpack.c.l.b16 %v1209
        %v1275 = vunpack.c.h.b16 %v1209
        %v1276 = vunpack.c.l.b16 %v1210
        %v1277 = vunpack.c.h.b16 %v1210
        %v1278 = vunpack.c.l.b16 %v1211
        %v1279 = vunpack.c.h.b16 %v1211
        %v1280 = vunpack.c.l.b16 %v1212
        %v1281 = vunpack.c.h.b16 %v1212
        %v1282 = vunpack.c.l.b16 %v1213
        %v1283 = vunpack.c.h.b16 %v1213
        %v1284 = vunpack.c.l.b16 %v1214
        %v1285 = vunpack.c.h.b16 %v1214
        %v1286 = vunpack.c.l.b16 %v1215
        %v1287 = vunpack.c.h.b16 %v1215
        %v1288 = vunpack.c.l.b16 %v1216
        %v1289 = vunpack.c.h.b16 %v1216
        %v1290 = vunpack.c.l.b16 %v1217
        %v1291 = vunpack.c.h.b16 %v1217
        %v1292 = vunpack.c.l.b16 %v1218
        %v1293 = vunpack.c.h.b16 %v1218
        %v1294 = vunpack.c.l.b16 %v1219
        %v1295 = vunpack.c.h.b16 %v1219
        %v1296 = vunpack.c.l.b16 %v1220
        %v1297 = vunpack.c.h.b16 %v1220
        %v1298 = vunpack.c.l.b16 %v1221
        %v1299 = vunpack.c.h.b16 %v1221
        %v1300 = vunpack.c.l.b16 %v1222
        %v1301 = vunpack.c.h.b16 %v1222
        %v1302 = vunpack.c.l.b16 %v1223
        %v1303 = vunpack.c.h.b16 %v1223
        %v1304 = vunpack.c.l.b16 %v1224
        %v1305 = vunpack.c.h.b16 %v1224
        %v1306 = vunpack.c.l.b16 %v1225
        %v1307 = vunpack.c.h.b16 %v1225
        %v1308 = vunpack.c.l.b16 %v1226
        %v1309 = vunpack.c.h.b16 %v1226
        %v1310 = vunpack.c.l.b16 %v1227
        %v1311 = vunpack.c.h.b16 %v1227
        %v1312 = vunpack.c.l.b16 %v1228
        %v1313 = vunpack.c.h.b16 %v1228
        %v1314 = vunpack.c.l.b16 %v1229
        %v1315 = vunpack.c.h.b16 %v1229
        %v1316 = vunpack.c.l.b16 %v1230
        %v1317 = vunpack.c.h.b16 %v1230
        %v1318 = vunpack.c.l.b16 %v1231
        %v1319 = vunpack.c.h.b16 %v1231
        %v1320 = vunpack.c.l.b16 %v1232
        %v1321 = vunpack.c.h.b16 %v1232
        %v1322 = vunpack.c.l.b16 %v1233
        %v1323 = vunpack.c.h.b16 %v1233
        %v1324 = vunpack.c.l.b16 %v1234
        %v1325 = vunpack.c.h.b16 %v1234
        %v1326 = vunpack.c.l.b16 %v1235
        %v1327 = vunpack.c.h.b16 %v1235
        %v1328 = vunpack.c.l.b16 %v1236
        %v1329 = vunpack.c.h.b16 %v1236
        %v1330 = vunpack.c.l.b16 %v1237
        %v1331 = vunpack.c.h.b16 %v1237
        %v1332 = vunpack.c.l.b16 %v1238
        %v1333 = vunpack.c.h.b16 %v1238
        %v1334 = vunpack.c.l.b16 %v1239
        %v1335 = vunpack.c.h.b16 %v1239
        %v1336 = vpack.c.b16 %v1272, %v1272
        %v1337 = vpack.c.b16 %v1273, %v1273
        %v1338 = vpack.c.b16 %v1274, %v1274
        %v1339 = vpack.c.b16 %v1275, %v1275
        %v1340 = vpack.c.b16 %v1276, %v1276
        %v1341 = vpack.c.b16 %v1277, %v1277
        %v1342 = vpack.c.b16 %v1278, %v1278
        %v1343 = vpack.c.b16 %v1279, %v1279
        %v1344 = vpack.c.b16 %v1280, %v1280
        %v1345 = vpack.c.b16 %v1281, %v1281
        %v1346 = vpack.c.b16 %v1282, %v1282
        %v1347 = vpack.c.b16 %v1283, %v1283
        %v1348 = vpack.c.b16 %v1284, %v1284
        %v1349 = vpack.c.b16 %v1285, %v1285
        %v1350 = vpack.c.b16 %v1286, %v1286
        %v1351 = vpack.c.b16 %v1287, %v1287
        %v1352 = vpack.c.b16 %v1288, %v1288
        %v1353 = vpack.c.b16 %v1289, %v1289
        %v1354 = vpack.c.b16 %v1290, %v1290
        %v1355 = vpack.c.b16 %v1291, %v1291
        %v1356 = vpack.c.b16 %v1292, %v1292
        %v1357 = vpack.c.b16 %v1293, %v1293
        %v1358 = vpack.c.b16 %v1294, %v1294
        %v1359 = vpack.c.b16 %v1295, %v1295
        %v1360 = vpack.c.b16 %v1296, %v1296
        %v1361 = vpack.c.b16 %v1297, %v1297
        %v1362 = vpack.c.b16 %v1298, %v1298
        %v1363 = vpack.c.b16 %v1299, %v1299
        %v1364 = vpack.c.b16 %v1300, %v1300
        %v1365 = vpack.c.b16 %v1301, %v1301
        %v1366 = vpack.c.b16 %v1302, %v1302
        %v1367 = vpack.c.b16 %v1303, %v1303
        %v1368 = vpack.c.b16 %v1304, %v1304
        %v1369 = vpack.c.b16 %v1305, %v1305
        %v1370 = vpack.c.b16 %v1306, %v1306
        %v1371 = vpack.c.b16 %v1307, %v1307
        %v1372 = vpack.c.b16 %v1308, %v1308
        %v1373 = vpack.c.b16 %v1309, %v1309
        %v1374 = vpack.c.b16 %v1310, %v1310
        %v1375 = vpack.c.b16 %v1311, %v1311
        %v1376 = vpack.c.b16 %v1312, %v1312
        %v1377 = vpack.c.b16 %v1313, %v1313
        %v1378 = vpack.c.b16 %v1314, %v1314
        %v1379 = vpack.c.b16 %v1315, %v1315
        %v1380 = vpack.c.b16 %v1316, %v1316
        %v1381 = vpack.c.b16 %v1317, %v1317
        %v1382 = vpack.c.b16 %v1318, %v1318
        %v1383 = vpack.c.b16 %v1319, %v1319
        %v1384 = vpack.c.b16 %v1320, %v1320
        %v1385 = vpack.c.b16 %v1321, %v1321
        %v1386 = vpack.c.b16 %v1322, %v1322
        %v1387 = vpack.c.b16 %v1323, %v1323
        %v1388 = vpack.c.b16 %v1324, %v1324
        %v1389 = vpack.c.b16 %v1325, %v1325
        %v1390 = vpack.c.b16 %v1326, %v1326
        %v1391 = vpack.c.b16 %v1327, %v1327
        %v1392 = vpack.c.b16 %v1328, %v1328
        %v1393 = vpack.c.b16 %v1329, %v1329
        %v1394 = vpack.c.b16 %v1330, %v1330
        %v1395 = vpack.c.b16 %v1331, %v1331
        %v1396 = vpack.c.b16 %v1332, %v1332
        %v1397 = vpack.c.b16 %v1333, %v1333
        %v1398 = vpack.c.b16 %v1334, %v1334
        %v1399 = vpack.c.b16 %v1335, %v1335
        %vm1464 = vcmask 175104
        %1465 = vst.msk [vmem:[%s226] sm:$0xf] %vm1464, %v1336
        %1466 = vst.msk [vmem:[%s226 + $0x4] sm:$0xf] %vm1464, %v1337
        %1467 = vst.msk [vmem:[%s226 + $0x8] sm:$0xf] %vm1464, %v1338
        %1468 = vst.msk [vmem:[%s226 + $0xc] sm:$0xf] %vm1464, %v1339
        %1469 = vst.msk [vmem:[%s226 + $0x10] sm:$0xf] %vm1464, %v1340
        %1470 = vst.msk [vmem:[%s226 + $0x14] sm:$0xf] %vm1464, %v1341
        %1471 = vst.msk [vmem:[%s226 + $0x18] sm:$0xf] %vm1464, %v1342
        %1472 = vst.msk [vmem:[%s226 + $0x1c] sm:$0xf] %vm1464, %v1343
        %1473 = vst.msk [vmem:[%s226 + $0x20] sm:$0xf] %vm1464, %v1344
        %1474 = vst.msk [vmem:[%s226 + $0x24] sm:$0xf] %vm1464, %v1345
        %1475 = vst.msk [vmem:[%s226 + $0x28] sm:$0xf] %vm1464, %v1346
        %1476 = vst.msk [vmem:[%s226 + $0x2c] sm:$0xf] %vm1464, %v1347
        %1477 = vst.msk [vmem:[%s226 + $0x30] sm:$0xf] %vm1464, %v1348
        %1478 = vst.msk [vmem:[%s226 + $0x34] sm:$0xf] %vm1464, %v1349
        %1479 = vst.msk [vmem:[%s226 + $0x38] sm:$0xf] %vm1464, %v1350
        %1480 = vst.msk [vmem:[%s226 + $0x3c] sm:$0xf] %vm1464, %v1351
        %1481 = vst.msk [vmem:[%s226 + $0x40] sm:$0xf] %vm1464, %v1352
        %1482 = vst.msk [vmem:[%s226 + $0x44] sm:$0xf] %vm1464, %v1353
        %1483 = vst.msk [vmem:[%s226 + $0x48] sm:$0xf] %vm1464, %v1354
        %1484 = vst.msk [vmem:[%s226 + $0x4c] sm:$0xf] %vm1464, %v1355
        %1485 = vst.msk [vmem:[%s226 + $0x50] sm:$0xf] %vm1464, %v1356
        %1486 = vst.msk [vmem:[%s226 + $0x54] sm:$0xf] %vm1464, %v1357
        %1487 = vst.msk [vmem:[%s226 + $0x58] sm:$0xf] %vm1464, %v1358
        %1488 = vst.msk [vmem:[%s226 + $0x5c] sm:$0xf] %vm1464, %v1359
        %1489 = vst.msk [vmem:[%s226 + $0x60] sm:$0xf] %vm1464, %v1360
        %1490 = vst.msk [vmem:[%s226 + $0x64] sm:$0xf] %vm1464, %v1361
        %1491 = vst.msk [vmem:[%s226 + $0x68] sm:$0xf] %vm1464, %v1362
        %1492 = vst.msk [vmem:[%s226 + $0x6c] sm:$0xf] %vm1464, %v1363
        %1493 = vst.msk [vmem:[%s226 + $0x70] sm:$0xf] %vm1464, %v1364
        %1494 = vst.msk [vmem:[%s226 + $0x74] sm:$0xf] %vm1464, %v1365
        %1495 = vst.msk [vmem:[%s226 + $0x78] sm:$0xf] %vm1464, %v1366
        %1496 = vst.msk [vmem:[%s226 + $0x7c] sm:$0xf] %vm1464, %v1367
        %1497 = vst.msk [vmem:[%s226 + $0x80] sm:$0xf] %vm1464, %v1368
        %1498 = vst.msk [vmem:[%s226 + $0x84] sm:$0xf] %vm1464, %v1369
        %1499 = vst.msk [vmem:[%s226 + $0x88] sm:$0xf] %vm1464, %v1370
        %1500 = vst.msk [vmem:[%s226 + $0x8c] sm:$0xf] %vm1464, %v1371
        %1501 = vst.msk [vmem:[%s226 + $0x90] sm:$0xf] %vm1464, %v1372
        %1502 = vst.msk [vmem:[%s226 + $0x94] sm:$0xf] %vm1464, %v1373
        %1503 = vst.msk [vmem:[%s226 + $0x98] sm:$0xf] %vm1464, %v1374
        %1504 = vst.msk [vmem:[%s226 + $0x9c] sm:$0xf] %vm1464, %v1375
        %1505 = vst.msk [vmem:[%s226 + $0xa0] sm:$0xf] %vm1464, %v1376
        %1506 = vst.msk [vmem:[%s226 + $0xa4] sm:$0xf] %vm1464, %v1377
        %1507 = vst.msk [vmem:[%s226 + $0xa8] sm:$0xf] %vm1464, %v1378
        %1508 = vst.msk [vmem:[%s226 + $0xac] sm:$0xf] %vm1464, %v1379
        %1509 = vst.msk [vmem:[%s226 + $0xb0] sm:$0xf] %vm1464, %v1380
        %1510 = vst.msk [vmem:[%s226 + $0xb4] sm:$0xf] %vm1464, %v1381
        %1511 = vst.msk [vmem:[%s226 + $0xb8] sm:$0xf] %vm1464, %v1382
        %1512 = vst.msk [vmem:[%s226 + $0xbc] sm:$0xf] %vm1464, %v1383
        %1513 = vst.msk [vmem:[%s226 + $0xc0] sm:$0xf] %vm1464, %v1384
        %1514 = vst.msk [vmem:[%s226 + $0xc4] sm:$0xf] %vm1464, %v1385
        %1515 = vst.msk [vmem:[%s226 + $0xc8] sm:$0xf] %vm1464, %v1386
        %1516 = vst.msk [vmem:[%s226 + $0xcc] sm:$0xf] %vm1464, %v1387
        %1517 = vst.msk [vmem:[%s226 + $0xd0] sm:$0xf] %vm1464, %v1388
        %1518 = vst.msk [vmem:[%s226 + $0xd4] sm:$0xf] %vm1464, %v1389
        %1519 = vst.msk [vmem:[%s226 + $0xd8] sm:$0xf] %vm1464, %v1390
        %1520 = vst.msk [vmem:[%s226 + $0xdc] sm:$0xf] %vm1464, %v1391
        %1521 = vst.msk [vmem:[%s226 + $0xe0] sm:$0xf] %vm1464, %v1392
        %1522 = vst.msk [vmem:[%s226 + $0xe4] sm:$0xf] %vm1464, %v1393
        %1523 = vst.msk [vmem:[%s226 + $0xe8] sm:$0xf] %vm1464, %v1394
        %1524 = vst.msk [vmem:[%s226 + $0xec] sm:$0xf] %vm1464, %v1395
        %1525 = vst.msk [vmem:[%s226 + $0xf0] sm:$0xf] %vm1464, %v1396
        %1526 = vst.msk [vmem:[%s226 + $0xf4] sm:$0xf] %vm1464, %v1397
        %1527 = vst.msk [vmem:[%s226 + $0xf8] sm:$0xf] %vm1464, %v1398
        %1528 = vst.msk [vmem:[%s226 + $0xfc] sm:$0xf] %vm1464, %v1399
        %s1529 = sand.u32 %s134, 1
        %s1530 = sand.u32 %s134, 1
        %s1531 = smul.addr %s1530, 256
        %s1532 = scalar_lea.vmem [#allocation2], %s1531
        // Predicated region
        $region41: #{tpu_custom_call.1} parent=39 // pred_check
          %p1533 = pneg %p144
        $region42: #{tpu_custom_call.1} parent=39 // pred_check_branch
          %1535 = sbr.rel (%p1533) target = $region44
        $region43: #{tpu_custom_call.1} parent=39 // pred_region
          %s1536 = smul.u32 64, %s16
          %s1537 = ssub.s32 125, %s1536
          %p1538 = scmp.lt.s32.totalorder %s1537, 64
          %s1539 = scalar_select %p1538, %s1537, 64
          %s1540 = smul.u32 64, %s1539
          %p1541 = scmp.ne.s32.totalorder 0, %s1540
          %s1542 = smul.addr %s1536, 4
          %s1543 = scalar_lea.vmem %s5, %s1542
          // Predicated region
          $region45: #{tpu_custom_call.1} parent=43 // pred_check
            %p1544 = pneg %p1541
          $region46: #{tpu_custom_call.1} parent=43 // pred_check_branch
            %1546 = sbr.rel (%p1544) target = $region48
          $region47: #{tpu_custom_call.1} parent=43 // pred_region
            // Predicated region
            $region49: #{tpu_custom_call.1} parent=47 // pred_check
              _
            $region50: #{tpu_custom_call.1} parent=47 // pred_check_branch
              %1548 = sbr.rel target = $region52
            $region51: #{tpu_custom_call.1} parent=47 // pred_region
              // Predicated region
              $region71: #{tpu_custom_call.1} parent=51 // pred_check
                _
              $region72: #{tpu_custom_call.1} parent=51 // pred_check_branch
                %1723 = sbr.rel (0) target = $region74
              $region73: #{tpu_custom_call.1} parent=51 // pred_region
                %s1725 = sshrl.u32 %s1539, 6
                // While loop
                $region75: #{tpu_custom_call.1} parent=73 // loop_pre_header
                  _
                $region76: #{tpu_custom_call.1} parent=73 // loop_header
                  %s1727 = sphi 0, %s1729
                  %p1728 = scmp.ge.s32.totalorder %s1727, %s1725
                  %s1732 = sphi 0, %s1865
                  %s1733 = sphi %s1532, %s1868
                  %s1734 = sphi %s1543, %s1869
                $region77: #{tpu_custom_call.1} parent=73 // loop_header_branch
                  %1731 = sbr.rel (%p1728) target = $region81
                $region78: #{tpu_custom_call.1} parent=73 // loop_body
                  %v1735 = vld [vmem:[%s1733] sm:$0xf]
                  %1736 = vst [vmem:[%s1734] sm:$0xf] %v1735
                  %v1737 = vld [vmem:[%s1733 + $0x4] sm:$0xf]
                  %1738 = vst [vmem:[%s1734 + $0x4] sm:$0xf] %v1737
                  %v1739 = vld [vmem:[%s1733 + $0x8] sm:$0xf]
                  %1740 = vst [vmem:[%s1734 + $0x8] sm:$0xf] %v1739
                  %v1741 = vld [vmem:[%s1733 + $0xc] sm:$0xf]
                  %1742 = vst [vmem:[%s1734 + $0xc] sm:$0xf] %v1741
                  %v1743 = vld [vmem:[%s1733 + $0x10] sm:$0xf]
                  %1744 = vst [vmem:[%s1734 + $0x10] sm:$0xf] %v1743
                  %v1745 = vld [vmem:[%s1733 + $0x14] sm:$0xf]
                  %1746 = vst [vmem:[%s1734 + $0x14] sm:$0xf] %v1745
                  %v1747 = vld [vmem:[%s1733 + $0x18] sm:$0xf]
                  %1748 = vst [vmem:[%s1734 + $0x18] sm:$0xf] %v1747
                  %v1749 = vld [vmem:[%s1733 + $0x1c] sm:$0xf]
                  %1750 = vst [vmem:[%s1734 + $0x1c] sm:$0xf] %v1749
                  %v1751 = vld [vmem:[%s1733 + $0x20] sm:$0xf]
                  %1752 = vst [vmem:[%s1734 + $0x20] sm:$0xf] %v1751
                  %v1753 = vld [vmem:[%s1733 + $0x24] sm:$0xf]
                  %1754 = vst [vmem:[%s1734 + $0x24] sm:$0xf] %v1753
                  %v1755 = vld [vmem:[%s1733 + $0x28] sm:$0xf]
                  %1756 = vst [vmem:[%s1734 + $0x28] sm:$0xf] %v1755
                  %v1757 = vld [vmem:[%s1733 + $0x2c] sm:$0xf]
                  %1758 = vst [vmem:[%s1734 + $0x2c] sm:$0xf] %v1757
                  %v1759 = vld [vmem:[%s1733 + $0x30] sm:$0xf]
                  %1760 = vst [vmem:[%s1734 + $0x30] sm:$0xf] %v1759
                  %v1761 = vld [vmem:[%s1733 + $0x34] sm:$0xf]
                  %1762 = vst [vmem:[%s1734 + $0x34] sm:$0xf] %v1761
                  %v1763 = vld [vmem:[%s1733 + $0x38] sm:$0xf]
                  %1764 = vst [vmem:[%s1734 + $0x38] sm:$0xf] %v1763
                  %v1765 = vld [vmem:[%s1733 + $0x3c] sm:$0xf]
                  %1766 = vst [vmem:[%s1734 + $0x3c] sm:$0xf] %v1765
                  %v1767 = vld [vmem:[%s1733 + $0x40] sm:$0xf]
                  %1768 = vst [vmem:[%s1734 + $0x40] sm:$0xf] %v1767
                  %v1769 = vld [vmem:[%s1733 + $0x44] sm:$0xf]
                  %1770 = vst [vmem:[%s1734 + $0x44] sm:$0xf] %v1769
                  %v1771 = vld [vmem:[%s1733 + $0x48] sm:$0xf]
                  %1772 = vst [vmem:[%s1734 + $0x48] sm:$0xf] %v1771
                  %v1773 = vld [vmem:[%s1733 + $0x4c] sm:$0xf]
                  %1774 = vst [vmem:[%s1734 + $0x4c] sm:$0xf] %v1773
                  %v1775 = vld [vmem:[%s1733 + $0x50] sm:$0xf]
                  %1776 = vst [vmem:[%s1734 + $0x50] sm:$0xf] %v1775
                  %v1777 = vld [vmem:[%s1733 + $0x54] sm:$0xf]
                  %1778 = vst [vmem:[%s1734 + $0x54] sm:$0xf] %v1777
                  %v1779 = vld [vmem:[%s1733 + $0x58] sm:$0xf]
                  %1780 = vst [vmem:[%s1734 + $0x58] sm:$0xf] %v1779
                  %v1781 = vld [vmem:[%s1733 + $0x5c] sm:$0xf]
                  %1782 = vst [vmem:[%s1734 + $0x5c] sm:$0xf] %v1781
                  %v1783 = vld [vmem:[%s1733 + $0x60] sm:$0xf]
                  %1784 = vst [vmem:[%s1734 + $0x60] sm:$0xf] %v1783
                  %v1785 = vld [vmem:[%s1733 + $0x64] sm:$0xf]
                  %1786 = vst [vmem:[%s1734 + $0x64] sm:$0xf] %v1785
                  %v1787 = vld [vmem:[%s1733 + $0x68] sm:$0xf]
                  %1788 = vst [vmem:[%s1734 + $0x68] sm:$0xf] %v1787
                  %v1789 = vld [vmem:[%s1733 + $0x6c] sm:$0xf]
                  %1790 = vst [vmem:[%s1734 + $0x6c] sm:$0xf] %v1789
                  %v1791 = vld [vmem:[%s1733 + $0x70] sm:$0xf]
                  %1792 = vst [vmem:[%s1734 + $0x70] sm:$0xf] %v1791
                  %v1793 = vld [vmem:[%s1733 + $0x74] sm:$0xf]
                  %1794 = vst [vmem:[%s1734 + $0x74] sm:$0xf] %v1793
                  %v1795 = vld [vmem:[%s1733 + $0x78] sm:$0xf]
                  %1796 = vst [vmem:[%s1734 + $0x78] sm:$0xf] %v1795
                  %v1797 = vld [vmem:[%s1733 + $0x7c] sm:$0xf]
                  %1798 = vst [vmem:[%s1734 + $0x7c] sm:$0xf] %v1797
                  %v1799 = vld [vmem:[%s1733 + $0x80] sm:$0xf]
                  %1800 = vst [vmem:[%s1734 + $0x80] sm:$0xf] %v1799
                  %v1801 = vld [vmem:[%s1733 + $0x84] sm:$0xf]
                  %1802 = vst [vmem:[%s1734 + $0x84] sm:$0xf] %v1801
                  %v1803 = vld [vmem:[%s1733 + $0x88] sm:$0xf]
                  %1804 = vst [vmem:[%s1734 + $0x88] sm:$0xf] %v1803
                  %v1805 = vld [vmem:[%s1733 + $0x8c] sm:$0xf]
                  %1806 = vst [vmem:[%s1734 + $0x8c] sm:$0xf] %v1805
                  %v1807 = vld [vmem:[%s1733 + $0x90] sm:$0xf]
                  %1808 = vst [vmem:[%s1734 + $0x90] sm:$0xf] %v1807
                  %v1809 = vld [vmem:[%s1733 + $0x94] sm:$0xf]
                  %1810 = vst [vmem:[%s1734 + $0x94] sm:$0xf] %v1809
                  %v1811 = vld [vmem:[%s1733 + $0x98] sm:$0xf]
                  %1812 = vst [vmem:[%s1734 + $0x98] sm:$0xf] %v1811
                  %v1813 = vld [vmem:[%s1733 + $0x9c] sm:$0xf]
                  %1814 = vst [vmem:[%s1734 + $0x9c] sm:$0xf] %v1813
                  %v1815 = vld [vmem:[%s1733 + $0xa0] sm:$0xf]
                  %1816 = vst [vmem:[%s1734 + $0xa0] sm:$0xf] %v1815
                  %v1817 = vld [vmem:[%s1733 + $0xa4] sm:$0xf]
                  %1818 = vst [vmem:[%s1734 + $0xa4] sm:$0xf] %v1817
                  %v1819 = vld [vmem:[%s1733 + $0xa8] sm:$0xf]
                  %1820 = vst [vmem:[%s1734 + $0xa8] sm:$0xf] %v1819
                  %v1821 = vld [vmem:[%s1733 + $0xac] sm:$0xf]
                  %1822 = vst [vmem:[%s1734 + $0xac] sm:$0xf] %v1821
                  %v1823 = vld [vmem:[%s1733 + $0xb0] sm:$0xf]
                  %1824 = vst [vmem:[%s1734 + $0xb0] sm:$0xf] %v1823
                  %v1825 = vld [vmem:[%s1733 + $0xb4] sm:$0xf]
                  %1826 = vst [vmem:[%s1734 + $0xb4] sm:$0xf] %v1825
                  %v1827 = vld [vmem:[%s1733 + $0xb8] sm:$0xf]
                  %1828 = vst [vmem:[%s1734 + $0xb8] sm:$0xf] %v1827
                  %v1829 = vld [vmem:[%s1733 + $0xbc] sm:$0xf]
                  %1830 = vst [vmem:[%s1734 + $0xbc] sm:$0xf] %v1829
                  %v1831 = vld [vmem:[%s1733 + $0xc0] sm:$0xf]
                  %1832 = vst [vmem:[%s1734 + $0xc0] sm:$0xf] %v1831
                  %v1833 = vld [vmem:[%s1733 + $0xc4] sm:$0xf]
                  %1834 = vst [vmem:[%s1734 + $0xc4] sm:$0xf] %v1833
                  %v1835 = vld [vmem:[%s1733 + $0xc8] sm:$0xf]
                  %1836 = vst [vmem:[%s1734 + $0xc8] sm:$0xf] %v1835
                  %v1837 = vld [vmem:[%s1733 + $0xcc] sm:$0xf]
                  %1838 = vst [vmem:[%s1734 + $0xcc] sm:$0xf] %v1837
                  %v1839 = vld [vmem:[%s1733 + $0xd0] sm:$0xf]
                  %1840 = vst [vmem:[%s1734 + $0xd0] sm:$0xf] %v1839
                  %v1841 = vld [vmem:[%s1733 + $0xd4] sm:$0xf]
                  %1842 = vst [vmem:[%s1734 + $0xd4] sm:$0xf] %v1841
                  %v1843 = vld [vmem:[%s1733 + $0xd8] sm:$0xf]
                  %1844 = vst [vmem:[%s1734 + $0xd8] sm:$0xf] %v1843
                  %v1845 = vld [vmem:[%s1733 + $0xdc] sm:$0xf]
                  %1846 = vst [vmem:[%s1734 + $0xdc] sm:$0xf] %v1845
                  %v1847 = vld [vmem:[%s1733 + $0xe0] sm:$0xf]
                  %1848 = vst [vmem:[%s1734 + $0xe0] sm:$0xf] %v1847
                  %v1849 = vld [vmem:[%s1733 + $0xe4] sm:$0xf]
                  %1850 = vst [vmem:[%s1734 + $0xe4] sm:$0xf] %v1849
                  %v1851 = vld [vmem:[%s1733 + $0xe8] sm:$0xf]
                  %1852 = vst [vmem:[%s1734 + $0xe8] sm:$0xf] %v1851
                  %v1853 = vld [vmem:[%s1733 + $0xec] sm:$0xf]
                  %1854 = vst [vmem:[%s1734 + $0xec] sm:$0xf] %v1853
                  %v1855 = vld [vmem:[%s1733 + $0xf0] sm:$0xf]
                  %1856 = vst [vmem:[%s1734 + $0xf0] sm:$0xf] %v1855
                  %v1857 = vld [vmem:[%s1733 + $0xf4] sm:$0xf]
                  %1858 = vst [vmem:[%s1734 + $0xf4] sm:$0xf] %v1857
                  %v1859 = vld [vmem:[%s1733 + $0xf8] sm:$0xf]
                  %1860 = vst [vmem:[%s1734 + $0xf8] sm:$0xf] %v1859
                  %v1861 = vld [vmem:[%s1733 + $0xfc] sm:$0xf]
                  %1862 = vst [vmem:[%s1734 + $0xfc] sm:$0xf] %v1861
                  %s1863 = sadd.s32 1, %s1732
                  %p1864 = scmp.ge.s32.totalorder %s1863, %s1725
                  %s1865 = scalar_select %p1864, 0, %s1863
                  %s1866 = smul.u32 %s1865, 256
                  %s1867 = smul.u32 %s1865, 256
                  %s1868 = scalar_lea.vmem %s1532, %s1866 [#allocation2]
                  %s1869 = scalar_lea.vmem %s1543, %s1867
                $region79: #{tpu_custom_call.1} parent=73 // loop_footer
                  %s1729 = sadd.s32 %s1727, 1
                $region80: #{tpu_custom_call.1} parent=73 // loop_footer_branch
                  %1726 = sbr.rel target = $region76
                $region81: #{tpu_custom_call.1} parent=73 // loop_exit
                  _
                %s1870 = sshrl.u32 %s1539, 6
                %s1871 = sand.u32 %s1539, 63
                %s1872 = smul.u32 %s1870, 64
                %s1873 = smul.u32 4, %s1872
                %s1874 = scalar_lea.vmem %s1532, %s1873 [#allocation2]
                %s1875 = smul.u32 4, %s1872
                %s1876 = scalar_lea.vmem %s1543, %s1875
                // While loop
                $region82: #{tpu_custom_call.1} parent=73 // loop_pre_header
                  _
                $region83: #{tpu_custom_call.1} parent=73 // loop_header
                  %s1878 = sphi 0, %s1880
                  %p1879 = scmp.ge.s32.totalorder %s1878, %s1871
                  %s1883 = sphi 0, %s1890
                  %s1884 = sphi %s1874, %s1893
                  %s1885 = sphi %s1876, %s1894
                $region84: #{tpu_custom_call.1} parent=73 // loop_header_branch
                  %1882 = sbr.rel (%p1879) target = $region88
                $region85: #{tpu_custom_call.1} parent=73 // loop_body
                  %v1886 = vld [vmem:[%s1884] sm:$0xf]
                  %1887 = vst [vmem:[%s1885] sm:$0xf] %v1886
                  %s1888 = sadd.s32 1, %s1883
                  %p1889 = scmp.ge.s32.totalorder %s1888, %s1871
                  %s1890 = scalar_select %p1889, 0, %s1888
                  %s1891 = smul.u32 %s1890, 4
                  %s1892 = smul.u32 %s1890, 4
                  %s1893 = scalar_lea.vmem %s1874, %s1891 [#allocation2]
                  %s1894 = scalar_lea.vmem %s1876, %s1892
                $region86: #{tpu_custom_call.1} parent=73 // loop_footer
                  %s1880 = sadd.s32 %s1878, 1
                $region87: #{tpu_custom_call.1} parent=73 // loop_footer_branch
                  %1877 = sbr.rel target = $region83
                $region88: #{tpu_custom_call.1} parent=73 // loop_exit
                  _
              $region74: #{tpu_custom_call.1} parent=51 // pred_fallthru
                _
            $region52: #{tpu_custom_call.1} parent=47 // pred_fallthru
              _
            // Predicated region
            $region53: #{tpu_custom_call.1} parent=47 // pred_check
              _
            $region54: #{tpu_custom_call.1} parent=47 // pred_check_branch
              %1550 = sbr.rel (0) target = $region56
            $region55: #{tpu_custom_call.1} parent=47 // pred_region
              %s1552 = sshrl.u32 %s1539, 6
              // While loop
              $region57: #{tpu_custom_call.1} parent=55 // loop_pre_header
                _
              $region58: #{tpu_custom_call.1} parent=55 // loop_header
                %s1554 = sphi 0, %s1556
                %p1555 = scmp.ge.s32.totalorder %s1554, %s1552
                %s1559 = sphi 0, %s1692
                %s1560 = sphi %s1532, %s1695
                %s1561 = sphi %s1543, %s1696
              $region59: #{tpu_custom_call.1} parent=55 // loop_header_branch
                %1558 = sbr.rel (%p1555) target = $region63
              $region60: #{tpu_custom_call.1} parent=55 // loop_body
                %v1562 = vld [vmem:[%s1560] sm:$0xf]
                %1563 = vst [vmem:[%s1561] sm:$0xf] %v1562
                %v1564 = vld [vmem:[%s1560 + $0x4] sm:$0xf]
                %1565 = vst [vmem:[%s1561 + $0x4] sm:$0xf] %v1564
                %v1566 = vld [vmem:[%s1560 + $0x8] sm:$0xf]
                %1567 = vst [vmem:[%s1561 + $0x8] sm:$0xf] %v1566
                %v1568 = vld [vmem:[%s1560 + $0xc] sm:$0xf]
                %1569 = vst [vmem:[%s1561 + $0xc] sm:$0xf] %v1568
                %v1570 = vld [vmem:[%s1560 + $0x10] sm:$0xf]
                %1571 = vst [vmem:[%s1561 + $0x10] sm:$0xf] %v1570
                %v1572 = vld [vmem:[%s1560 + $0x14] sm:$0xf]
                %1573 = vst [vmem:[%s1561 + $0x14] sm:$0xf] %v1572
                %v1574 = vld [vmem:[%s1560 + $0x18] sm:$0xf]
                %1575 = vst [vmem:[%s1561 + $0x18] sm:$0xf] %v1574
                %v1576 = vld [vmem:[%s1560 + $0x1c] sm:$0xf]
                %1577 = vst [vmem:[%s1561 + $0x1c] sm:$0xf] %v1576
                %v1578 = vld [vmem:[%s1560 + $0x20] sm:$0xf]
                %1579 = vst [vmem:[%s1561 + $0x20] sm:$0xf] %v1578
                %v1580 = vld [vmem:[%s1560 + $0x24] sm:$0xf]
                %1581 = vst [vmem:[%s1561 + $0x24] sm:$0xf] %v1580
                %v1582 = vld [vmem:[%s1560 + $0x28] sm:$0xf]
                %1583 = vst [vmem:[%s1561 + $0x28] sm:$0xf] %v1582
                %v1584 = vld [vmem:[%s1560 + $0x2c] sm:$0xf]
                %1585 = vst [vmem:[%s1561 + $0x2c] sm:$0xf] %v1584
                %v1586 = vld [vmem:[%s1560 + $0x30] sm:$0xf]
                %1587 = vst [vmem:[%s1561 + $0x30] sm:$0xf] %v1586
                %v1588 = vld [vmem:[%s1560 + $0x34] sm:$0xf]
                %1589 = vst [vmem:[%s1561 + $0x34] sm:$0xf] %v1588
                %v1590 = vld [vmem:[%s1560 + $0x38] sm:$0xf]
                %1591 = vst [vmem:[%s1561 + $0x38] sm:$0xf] %v1590
                %v1592 = vld [vmem:[%s1560 + $0x3c] sm:$0xf]
                %1593 = vst [vmem:[%s1561 + $0x3c] sm:$0xf] %v1592
                %v1594 = vld [vmem:[%s1560 + $0x40] sm:$0xf]
                %1595 = vst [vmem:[%s1561 + $0x40] sm:$0xf] %v1594
                %v1596 = vld [vmem:[%s1560 + $0x44] sm:$0xf]
                %1597 = vst [vmem:[%s1561 + $0x44] sm:$0xf] %v1596
                %v1598 = vld [vmem:[%s1560 + $0x48] sm:$0xf]
                %1599 = vst [vmem:[%s1561 + $0x48] sm:$0xf] %v1598
                %v1600 = vld [vmem:[%s1560 + $0x4c] sm:$0xf]
                %1601 = vst [vmem:[%s1561 + $0x4c] sm:$0xf] %v1600
                %v1602 = vld [vmem:[%s1560 + $0x50] sm:$0xf]
                %1603 = vst [vmem:[%s1561 + $0x50] sm:$0xf] %v1602
                %v1604 = vld [vmem:[%s1560 + $0x54] sm:$0xf]
                %1605 = vst [vmem:[%s1561 + $0x54] sm:$0xf] %v1604
                %v1606 = vld [vmem:[%s1560 + $0x58] sm:$0xf]
                %1607 = vst [vmem:[%s1561 + $0x58] sm:$0xf] %v1606
                %v1608 = vld [vmem:[%s1560 + $0x5c] sm:$0xf]
                %1609 = vst [vmem:[%s1561 + $0x5c] sm:$0xf] %v1608
                %v1610 = vld [vmem:[%s1560 + $0x60] sm:$0xf]
                %1611 = vst [vmem:[%s1561 + $0x60] sm:$0xf] %v1610
                %v1612 = vld [vmem:[%s1560 + $0x64] sm:$0xf]
                %1613 = vst [vmem:[%s1561 + $0x64] sm:$0xf] %v1612
                %v1614 = vld [vmem:[%s1560 + $0x68] sm:$0xf]
                %1615 = vst [vmem:[%s1561 + $0x68] sm:$0xf] %v1614
                %v1616 = vld [vmem:[%s1560 + $0x6c] sm:$0xf]
                %1617 = vst [vmem:[%s1561 + $0x6c] sm:$0xf] %v1616
                %v1618 = vld [vmem:[%s1560 + $0x70] sm:$0xf]
                %1619 = vst [vmem:[%s1561 + $0x70] sm:$0xf] %v1618
                %v1620 = vld [vmem:[%s1560 + $0x74] sm:$0xf]
                %1621 = vst [vmem:[%s1561 + $0x74] sm:$0xf] %v1620
                %v1622 = vld [vmem:[%s1560 + $0x78] sm:$0xf]
                %1623 = vst [vmem:[%s1561 + $0x78] sm:$0xf] %v1622
                %v1624 = vld [vmem:[%s1560 + $0x7c] sm:$0xf]
                %1625 = vst [vmem:[%s1561 + $0x7c] sm:$0xf] %v1624
                %v1626 = vld [vmem:[%s1560 + $0x80] sm:$0xf]
                %1627 = vst [vmem:[%s1561 + $0x80] sm:$0xf] %v1626
                %v1628 = vld [vmem:[%s1560 + $0x84] sm:$0xf]
                %1629 = vst [vmem:[%s1561 + $0x84] sm:$0xf] %v1628
                %v1630 = vld [vmem:[%s1560 + $0x88] sm:$0xf]
                %1631 = vst [vmem:[%s1561 + $0x88] sm:$0xf] %v1630
                %v1632 = vld [vmem:[%s1560 + $0x8c] sm:$0xf]
                %1633 = vst [vmem:[%s1561 + $0x8c] sm:$0xf] %v1632
                %v1634 = vld [vmem:[%s1560 + $0x90] sm:$0xf]
                %1635 = vst [vmem:[%s1561 + $0x90] sm:$0xf] %v1634
                %v1636 = vld [vmem:[%s1560 + $0x94] sm:$0xf]
                %1637 = vst [vmem:[%s1561 + $0x94] sm:$0xf] %v1636
                %v1638 = vld [vmem:[%s1560 + $0x98] sm:$0xf]
                %1639 = vst [vmem:[%s1561 + $0x98] sm:$0xf] %v1638
                %v1640 = vld [vmem:[%s1560 + $0x9c] sm:$0xf]
                %1641 = vst [vmem:[%s1561 + $0x9c] sm:$0xf] %v1640
                %v1642 = vld [vmem:[%s1560 + $0xa0] sm:$0xf]
                %1643 = vst [vmem:[%s1561 + $0xa0] sm:$0xf] %v1642
                %v1644 = vld [vmem:[%s1560 + $0xa4] sm:$0xf]
                %1645 = vst [vmem:[%s1561 + $0xa4] sm:$0xf] %v1644
                %v1646 = vld [vmem:[%s1560 + $0xa8] sm:$0xf]
                %1647 = vst [vmem:[%s1561 + $0xa8] sm:$0xf] %v1646
                %v1648 = vld [vmem:[%s1560 + $0xac] sm:$0xf]
                %1649 = vst [vmem:[%s1561 + $0xac] sm:$0xf] %v1648
                %v1650 = vld [vmem:[%s1560 + $0xb0] sm:$0xf]
                %1651 = vst [vmem:[%s1561 + $0xb0] sm:$0xf] %v1650
                %v1652 = vld [vmem:[%s1560 + $0xb4] sm:$0xf]
                %1653 = vst [vmem:[%s1561 + $0xb4] sm:$0xf] %v1652
                %v1654 = vld [vmem:[%s1560 + $0xb8] sm:$0xf]
                %1655 = vst [vmem:[%s1561 + $0xb8] sm:$0xf] %v1654
                %v1656 = vld [vmem:[%s1560 + $0xbc] sm:$0xf]
                %1657 = vst [vmem:[%s1561 + $0xbc] sm:$0xf] %v1656
                %v1658 = vld [vmem:[%s1560 + $0xc0] sm:$0xf]
                %1659 = vst [vmem:[%s1561 + $0xc0] sm:$0xf] %v1658
                %v1660 = vld [vmem:[%s1560 + $0xc4] sm:$0xf]
                %1661 = vst [vmem:[%s1561 + $0xc4] sm:$0xf] %v1660
                %v1662 = vld [vmem:[%s1560 + $0xc8] sm:$0xf]
                %1663 = vst [vmem:[%s1561 + $0xc8] sm:$0xf] %v1662
                %v1664 = vld [vmem:[%s1560 + $0xcc] sm:$0xf]
                %1665 = vst [vmem:[%s1561 + $0xcc] sm:$0xf] %v1664
                %v1666 = vld [vmem:[%s1560 + $0xd0] sm:$0xf]
                %1667 = vst [vmem:[%s1561 + $0xd0] sm:$0xf] %v1666
                %v1668 = vld [vmem:[%s1560 + $0xd4] sm:$0xf]
                %1669 = vst [vmem:[%s1561 + $0xd4] sm:$0xf] %v1668
                %v1670 = vld [vmem:[%s1560 + $0xd8] sm:$0xf]
                %1671 = vst [vmem:[%s1561 + $0xd8] sm:$0xf] %v1670
                %v1672 = vld [vmem:[%s1560 + $0xdc] sm:$0xf]
                %1673 = vst [vmem:[%s1561 + $0xdc] sm:$0xf] %v1672
                %v1674 = vld [vmem:[%s1560 + $0xe0] sm:$0xf]
                %1675 = vst [vmem:[%s1561 + $0xe0] sm:$0xf] %v1674
                %v1676 = vld [vmem:[%s1560 + $0xe4] sm:$0xf]
                %1677 = vst [vmem:[%s1561 + $0xe4] sm:$0xf] %v1676
                %v1678 = vld [vmem:[%s1560 + $0xe8] sm:$0xf]
                %1679 = vst [vmem:[%s1561 + $0xe8] sm:$0xf] %v1678
                %v1680 = vld [vmem:[%s1560 + $0xec] sm:$0xf]
                %1681 = vst [vmem:[%s1561 + $0xec] sm:$0xf] %v1680
                %v1682 = vld [vmem:[%s1560 + $0xf0] sm:$0xf]
                %1683 = vst [vmem:[%s1561 + $0xf0] sm:$0xf] %v1682
                %v1684 = vld [vmem:[%s1560 + $0xf4] sm:$0xf]
                %1685 = vst [vmem:[%s1561 + $0xf4] sm:$0xf] %v1684
                %v1686 = vld [vmem:[%s1560 + $0xf8] sm:$0xf]
                %1687 = vst [vmem:[%s1561 + $0xf8] sm:$0xf] %v1686
                %v1688 = vld [vmem:[%s1560 + $0xfc] sm:$0xf]
                %1689 = vst [vmem:[%s1561 + $0xfc] sm:$0xf] %v1688
                %s1690 = sadd.s32 1, %s1559
                %p1691 = scmp.ge.s32.totalorder %s1690, %s1552
                %s1692 = scalar_select %p1691, 0, %s1690
                %s1693 = smul.u32 %s1692, 256
                %s1694 = smul.u32 %s1692, 256
                %s1695 = scalar_lea.vmem %s1532, %s1693 [#allocation2]
                %s1696 = scalar_lea.vmem %s1543, %s1694
              $region61: #{tpu_custom_call.1} parent=55 // loop_footer
                %s1556 = sadd.s32 %s1554, 1
              $region62: #{tpu_custom_call.1} parent=55 // loop_footer_branch
                %1553 = sbr.rel target = $region58
              $region63: #{tpu_custom_call.1} parent=55 // loop_exit
                _
              %s1697 = sshrl.u32 %s1539, 6
              %s1698 = sand.u32 %s1539, 63
              %s1699 = smul.u32 %s1697, 64
              %s1700 = smul.u32 4, %s1699
              %s1701 = scalar_lea.vmem %s1532, %s1700 [#allocation2]
              %s1702 = smul.u32 4, %s1699
              %s1703 = scalar_lea.vmem %s1543, %s1702
              // While loop
              $region64: #{tpu_custom_call.1} parent=55 // loop_pre_header
                _
              $region65: #{tpu_custom_call.1} parent=55 // loop_header
                %s1705 = sphi 0, %s1707
                %p1706 = scmp.ge.s32.totalorder %s1705, %s1698
                %s1710 = sphi 0, %s1717
                %s1711 = sphi %s1701, %s1720
                %s1712 = sphi %s1703, %s1721
              $region66: #{tpu_custom_call.1} parent=55 // loop_header_branch
                %1709 = sbr.rel (%p1706) target = $region70
              $region67: #{tpu_custom_call.1} parent=55 // loop_body
                %v1713 = vld [vmem:[%s1711] sm:$0xf]
                %1714 = vst [vmem:[%s1712] sm:$0xf] %v1713
                %s1715 = sadd.s32 1, %s1710
                %p1716 = scmp.ge.s32.totalorder %s1715, %s1698
                %s1717 = scalar_select %p1716, 0, %s1715
                %s1718 = smul.u32 %s1717, 4
                %s1719 = smul.u32 %s1717, 4
                %s1720 = scalar_lea.vmem %s1701, %s1718 [#allocation2]
                %s1721 = scalar_lea.vmem %s1703, %s1719
              $region68: #{tpu_custom_call.1} parent=55 // loop_footer
                %s1707 = sadd.s32 %s1705, 1
              $region69: #{tpu_custom_call.1} parent=55 // loop_footer_branch
                %1704 = sbr.rel target = $region65
              $region70: #{tpu_custom_call.1} parent=55 // loop_exit
                _
            $region56: #{tpu_custom_call.1} parent=47 // pred_fallthru
              _
          $region48: #{tpu_custom_call.1} parent=43 // pred_fallthru
            _
          %1895 = vnop
        $region44: #{tpu_custom_call.1} parent=39 // pred_fallthru
          _
      $region40: #{tpu_custom_call.1} parent=5 // pred_fallthru
        _
      %p1896 = scmp.le.s32.totalorder 2, %s11
      // Predicated region
      $region89: #{tpu_custom_call.1} parent=5 // pred_check
        %p1897 = pneg %p1896
      $region90: #{tpu_custom_call.1} parent=5 // pred_check_branch
        %1899 = sbr.rel (%p1897) target = $region92
      $region91: #{tpu_custom_call.1} parent=5 // pred_region
        %s1900 = ssub.s32 %s11, 2
        // Predicated region
        $region93: #{tpu_custom_call.1} parent=91 // pred_check
          %p1901 = pneg %p150
        $region94: #{tpu_custom_call.1} parent=91 // pred_check_branch
          %1903 = sbr.rel (%p1901) target = $region96
        $region95: #{tpu_custom_call.1} parent=91 // pred_region
          %s1904 = sand.u32 %s135, 1
          %s1905 = sand.u32 %s135, 1
          %s1906 = smul.addr %s1905, 256
          %s1907 = scalar_lea.vmem [#allocation2], %s1906
        $region96: #{tpu_custom_call.1} parent=91 // pred_fallthru
          _
      $region92: #{tpu_custom_call.1} parent=5 // pred_fallthru
        _
    $region6: #{tpu_custom_call.1} parent=1 // loop_footer
      %s15 = sadd.s32 1, %s11
    $region7: #{tpu_custom_call.1} parent=1 // loop_footer_branch
      %10 = sbr.rel target = $region3
    $region8: #{tpu_custom_call.1} parent=1 // loop_exit
      _

</llo_original>
